<compile_context>
chip_gen: v7x
topology: tpu7x:2x2x1
jax: 0.10.0
libtpu: 0.0.40
codegen_flags: <defaults>
</compile_context>

<pallas_src>
import functools

import jax
import jax.numpy as jnp
from jax.experimental import pallas as pl
from jax.experimental.pallas import tpu as pltpu


def _covariance_kernel(x_ref, cov_ref, mean_ref, *, inv_rows, mxu_dtype):
    # x_ref: (bt, D, N) block; cov_ref: (bt, D, D); mean_ref: (bt, D, 1).
    x = x_ref[...].astype(jnp.float32)                        # (bt, D, N)
    mean = jnp.mean(x, axis=-1, keepdims=True)                 # (bt, D, 1), exact f32
    xc = (x - mean).astype(mxu_dtype)                          # centered; bf16 feeds MXU at native rate
    # Batched MXU matmul: (bt, D, N) x (bt, D, N) -> (bt, D, D), f32 accumulation.
    cov = jnp.einsum("bdn,ben->bde", xc, xc,
                     preferred_element_type=jnp.float32)
    cov_ref[...] = (cov * inv_rows).astype(cov_ref.dtype)
    mean_ref[...] = mean.astype(mean_ref.dtype)


def _tpu_hw():
    """Best-effort (physical VMEM bytes per TensorCore, TensorCores sharing the grid)."""
    phys_vmem = 64 << 20          # conservative fallback (v7x size)
    num_cores = 1
    try:
        info = pltpu.get_tpu_info()
        phys_vmem = int(getattr(info, "vmem_capacity_bytes", phys_vmem))
    except Exception:
        pass
    try:
        kind = jax.devices()[0].device_kind.lower()
        if any(tag in kind for tag in ("v7", "v4", "v5p", "v5 p")):
            num_cores = 2          # megacore / dual-TC parts
    except Exception:
        pass
    return phys_vmem, num_cores


def covariance(x, *, append_mean=False, vmem_budget_bytes=None, mxu_operand_dtype=None):
    """x: (B, D, N) -> (B, D, D)  (or (B, D+1, D+1) if append_mean)."""
    B, D, N = x.shape
    out_dtype = x.dtype
    in_itemsize = jnp.dtype(x.dtype).itemsize
    out_itemsize = jnp.dtype(out_dtype).itemsize

    phys_vmem, num_cores = _tpu_hw()

    if mxu_operand_dtype is None:
        # Centered values -> small relative error from bf16; pass jnp.float32 for exact path.
        mxu_operand_dtype = jnp.bfloat16 if x.dtype == jnp.float32 else x.dtype
    mxu_itemsize = jnp.dtype(mxu_operand_dtype).itemsize

    if vmem_budget_bytes is None:
        # Generous on 128 MiB parts (v5e/v6e), tighter on 64 MiB v7x.
        vmem_budget_bytes = min(phys_vmem // 2, 48 << 20)

    # Live VMEM per batch row: double-buffered input/output blocks + in-kernel f32 working
    # copy, the (bf16) centered operand and the f32 matmul accumulator.
    per_row = (2 * D * N * in_itemsize         # input block (x2 pipelining)
               + 2 * D * D * out_itemsize      # cov output block (x2 pipelining)
               + 2 * D * 4                     # mean output block (negligible)
               + D * N * 4                     # f32 working copy of x
               + D * N * mxu_itemsize          # centered MXU operand
               + D * D * 4)                    # f32 accumulator

    b_tile = max(1, min(B, vmem_budget_bytes // max(per_row, 1)))

    if num_cores >= 2 and B > 1:
        # Keep >= num_cores grid blocks so every TensorCore gets work ...
        b_tile = min(b_tile, pl.cdiv(B, num_cores))
        # ... and (best effort) a block count that is a multiple of num_cores so no TC
        # idles on the tail wave.
        if pl.cdiv(B, b_tile) % num_cores:
            for cand in range(b_tile - 1, max(b_tile // 2, 0), -1):
                if pl.cdiv(B, cand) % num_cores == 0:
                    b_tile = cand
                    break

    # Ragged last block is fine: rows are independent and partial writebacks are masked.
    grid = (pl.cdiv(B, b_tile),)

    # Scoped-VMEM limit: actual footprint + headroom, never above physical - 8 MiB.
    vmem_limit = int(b_tile * per_row + (8 << 20))
    vmem_limit = max(vmem_limit, 32 << 20)
    vmem_limit = min(vmem_limit, phys_vmem - (8 << 20))
    vmem_limit = max(vmem_limit, 16 << 20)

    kernel = functools.partial(_covariance_kernel, inv_rows=1.0 / D,
                               mxu_dtype=mxu_operand_dtype)

    cov, mean = pl.pallas_call(
        kernel,
        out_shape=(jax.ShapeDtypeStruct((B, D, D), out_dtype),
                   jax.ShapeDtypeStruct((B, D, 1), jnp.float32)),
        grid_spec=pltpu.PrefetchScalarGridSpec(
            num_scalar_prefetch=0,
            grid=grid,
            in_specs=[pl.BlockSpec((b_tile, D, N), lambda i: (i, 0, 0))],
            out_specs=[pl.BlockSpec((b_tile, D, D), lambda i: (i, 0, 0)),
                       pl.BlockSpec((b_tile, D, 1), lambda i: (i, 0, 0))],
        ),
        compiler_params=pltpu.CompilerParams(
            dimension_semantics=("parallel",),
            vmem_limit_bytes=vmem_limit,
        ),
    )(x)

    if not append_mean:
        return cov

    # O(B*D) bookkeeping tail in plain JAX; reuses the kernel's mean so x is NOT re-read.
    mean = mean.astype(out_dtype)                                        # (B, D, 1)
    out = cov + jnp.einsum("bdk,bek->bde", mean, mean)                   # + mean mean^T
    out = jnp.concatenate([out, mean], axis=2)                           # (B, D, D+1)
    one = jnp.ones((B, 1, 1), out_dtype)
    mean_row = jnp.concatenate([mean, one], axis=1).transpose(0, 2, 1)   # (B, 1, D+1)
    out = jnp.concatenate([out, mean_row], axis=1)                       # (B, D+1, D+1)
    return out


def covariance_ref(x, append_mean=False):
    """Pure-JAX reference mirroring the PyTorch forward."""
    B, D, N = x.shape
    mean = jnp.mean(x, axis=2, keepdims=True)
    xc = x - mean
    out = jnp.einsum("bdn,ben->bde", xc, xc) / D
    if append_mean:
        out = out + jnp.einsum("bdk,bek->bde", mean, mean)
        out = jnp.concatenate([out, mean], axis=2)
        one = jnp.ones((B, 1, 1), x.dtype)
        mean_row = jnp.concatenate([mean, one], axis=1).transpose(0, 2, 1)
        out = jnp.concatenate([out, mean_row], axis=1)
    return out


if __name__ == "__main__":
    # Small but lane-friendly shapes: D=128 makes the (B, D, D) output lane-dense.
    B, D, N = 4, 128, 256

    key = jax.random.PRNGKey(0)
    x = jax.random.normal(key, (B, D, N), dtype=jnp.float32)

    ref = covariance_ref(x)

    # Exact f32-operand path: tight tolerance, checks structure / tiling.
    out_exact = jax.block_until_ready(covariance(x, mxu_operand_dtype=jnp.float32))
    assert out_exact.shape == (B, D, D)
    assert jnp.allclose(out_exact, ref, atol=1e-4, rtol=1e-4), "mismatch vs reference (f32 path)"

    # Default path: bf16 MXU operands + f32 accumulation (looser tolerance).
    out = jax.block_until_ready(covariance(x))
    assert out.shape == (B, D, D)
    assert jnp.allclose(out, ref, atol=1e-2, rtol=1e-2), "mismatch vs reference (bf16 path)"

    # append_mean=True path (kernel mean output + plain-JAX concat tail).
    out_m = jax.block_until_ready(covariance(x, append_mean=True))
    ref_m = covariance_ref(x, append_mean=True)
    assert out_m.shape == (B, D + 1, D + 1)
    assert jnp.allclose(out_m, ref_m, atol=1e-2, rtol=1e-2), "mismatch vs reference (append_mean)"

    print("KERNEL_OK")
</pallas_src>

<mosaic_0001>
module attributes {stable_mosaic.version = 11 : i64} {
  func.func @_covariance_kernel(%arg0: i32, %arg1: memref<4x128x256xf32, #tpu.memory_space<vmem>>, %arg2: memref<4x128x128xf32, #tpu.memory_space<vmem>>, %arg3: memref<4x128x1xf32, #tpu.memory_space<vmem>>) attributes {dimension_semantics = [#tpu.dimension_semantics<parallel>], iteration_bounds = array<i64: 1>, scalar_prefetch = 0 : i64, scratch_operands = 0 : i64, tpu.core_type = #tpu.core_type<tc>, window_params = [{transform_indices = @transform_0, window_bounds = array<i64: 4, 128, 256>}, {transform_indices = @transform_1, window_bounds = array<i64: 4, 128, 128>}, {transform_indices = @transform_2, window_bounds = array<i64: 4, 128, 1>}]} {
    %c0 = arith.constant 0 : index
    %c0_0 = arith.constant 0 : index
    %c0_1 = arith.constant 0 : index
    %0 = vector.load %arg1[%c0, %c0_0, %c0_1] : memref<4x128x256xf32, #tpu.memory_space<vmem>>, vector<4x128x256xf32>
    %cst = arith.constant dense<0.000000e+00> : vector<4x128xf32>
    %1 = vector.multi_reduction <add>, %0, %cst [2] : vector<4x128x256xf32> to vector<4x128xf32>
    %2 = vector.shape_cast %1 : vector<4x128xf32> to vector<4x128x1xf32>
    %cst_2 = arith.constant 2.560000e+02 : f32
    %3 = vector.broadcast %cst_2 : f32 to vector<4x128x1xf32>
    %4 = arith.divf %2, %3 : vector<4x128x1xf32>
    %5 = vector.broadcast %4 : vector<4x128x1xf32> to vector<4x128x256xf32>
    %6 = arith.subf %0, %5 : vector<4x128x256xf32>
    "tpu.trace_start"() <{level = 10 : i32, message = "bdn,ben->bde"}> : () -> ()
    %cst_3 = arith.constant dense<0.000000e+00> : vector<4x128x128xf32>
    %7 = tpu.matmul %6, %6, %cst_3 {dimension_numbers = #tpu.dot_dimension_numbers<[2], [2], [1], [1], [0, 0, 0, 1, 1, 1], [0], [0]>} : vector<4x128x256xf32>, vector<4x128x256xf32>, vector<4x128x128xf32> -> vector<4x128x128xf32>
    "tpu.trace_stop"() : () -> ()
    %cst_4 = arith.constant 7.812500e-03 : f32
    %8 = vector.broadcast %cst_4 : f32 to vector<4x128x128xf32>
    %9 = arith.mulf %7, %8 : vector<4x128x128xf32>
    %c0_5 = arith.constant 0 : index
    %c0_6 = arith.constant 0 : index
    %c0_7 = arith.constant 0 : index
    %10 = vector.load %arg2[%c0_5, %c0_6, %c0_7] : memref<4x128x128xf32, #tpu.memory_space<vmem>>, vector<4x128x128xf32>
    tpu.vector_store %arg2[%c0_5, %c0_6, %c0_7], %9 {strides = array<i32>} : memref<4x128x128xf32, #tpu.memory_space<vmem>>, vector<4x128x128xf32>,
    %c0_8 = arith.constant 0 : index
    %c0_9 = arith.constant 0 : index
    %c0_10 = arith.constant 0 : index
    %11 = vector.load %arg3[%c0_8, %c0_9, %c0_10] : memref<4x128x1xf32, #tpu.memory_space<vmem>>, vector<4x128x1xf32>
    tpu.vector_store %arg3[%c0_8, %c0_9, %c0_10], %4 {strides = array<i32>} : memref<4x128x1xf32, #tpu.memory_space<vmem>>, vector<4x128x1xf32>,
    return
  }
  func.func @transform_0(%arg0: i32) -> (i32, i32, i32) {
    %c0_i32 = arith.constant 0 : i32
    %c0_i32_0 = arith.constant 0 : i32
    %c0_i32_1 = arith.constant 0 : i32
    return %arg0, %c0_i32, %c0_i32_0 : i32, i32, i32
  }
  func.func @transform_1(%arg0: i32) -> (i32, i32, i32) {
    %c0_i32 = arith.constant 0 : i32
    %c0_i32_0 = arith.constant 0 : i32
    %c0_i32_1 = arith.constant 0 : i32
    return %arg0, %c0_i32, %c0_i32_0 : i32, i32, i32
  }
  func.func @transform_2(%arg0: i32) -> (i32, i32, i32) {
    %c0_i32 = arith.constant 0 : i32
    %c0_i32_0 = arith.constant 0 : i32
    %c0_i32_1 = arith.constant 0 : i32
    return %arg0, %c0_i32, %c0_i32_0 : i32, i32, i32
  }
}

</mosaic_0001>

<llo_original>
// kernel: tpu_custom_call.1
$region0: #{tpu_custom_call.1}
  #allocation0 [shape = 'u32[]', space=smem, size = 0x4, offset = 0x4, fixed_abs, tag = 'smem constant byte address 0x4 - core index']
  #allocation1 [shape = 'u32[144,128]{1,0:T(1,128)}', space=vmem, size = 0x12000, scoped, tag = 'internal scratch']
  %s0 = inlined_call_operand.hbm [shape: f32[4,128,256], index: 0, kind: input, shape index: {}]
  %s1 = inlined_call_operand.hbm [shape: f32[4,128,128], index: 1, kind: output, shape index: {0}]
  %s2 = inlined_call_operand.vmem [shape: f32[4,128,1], index: 2, kind: output, shape index: {1}]
  %3 = xla_tuple %s1, %s2
  %s4 = sld [smem:[#allocation0]]
  $region26: #{tpu_custom_call.1} parent=0
    _
  %s6 = ssub.s32 1, %s4
  %s7 = scalar_select 0, %s6, %s4
  $region1: #{tpu_custom_call.1} parent=0
    #allocation2 [shape = 'u8[524288]{0}', space=vmem, size = 0x80000, scoped, tag = 'input window, operand 0, single buffered']
    #allocation3 [shape = 's32[1]{0}', space=sflag, size = 0x4, scoped, tag = 'scoped memory for tpu_custom_call.1']
    #allocation4 [shape = 's32[1]{0}', space=sflag, size = 0x4, scoped, tag = 'scoped memory for tpu_custom_call.1']
    #allocation5 [shape = 'u8[262144]{0}', space=vmem, size = 0x40000, scoped, tag = 'output window, operand 0, single buffered']
    %8 = vsyncpa [#allocation3], 0
    %9 = vsyncpa [#allocation4], 0
    // Predicated region
    $region2: #{tpu_custom_call.1} parent=1 // pred_check
      _
    $region3: #{tpu_custom_call.1} parent=1 // pred_check_branch
      %11 = sbr.rel (0) target = $region5
    $region4: #{tpu_custom_call.1} parent=1 // pred_region
      %s13 = ssub.s32 16384, 16384
      %14 = vsyncadd [#allocation3], %s13
      %s15 = sshll.u32 [#allocation2], 4
      %s16 = int_to_ptr.vmem [resolvable:$true] %s15
      %21 = dma.hbm_to_vmem [thread:$0]  %s0, 16384, %s16, [#allocation3], 256, 256, 16
    $region5: #{tpu_custom_call.1} parent=1 // pred_fallthru
      _
    // Predicated region
    $region6: #{tpu_custom_call.1} parent=1 // pred_check
      _
    $region7: #{tpu_custom_call.1} parent=1 // pred_check_branch
      %23 = sbr.rel (0) target = $region9
    $region8: #{tpu_custom_call.1} parent=1 // pred_region
      %24 = dma.done [#allocation3], 16384
    $region9: #{tpu_custom_call.1} parent=1 // pred_fallthru
      _
    %v25 = vld [vmem:[#allocation2] sm:$0xff]
    %v26 = vld [vmem:[#allocation2 + $0x8] sm:$0xff]
    %v27 = vld [vmem:[#allocation2 + $0x10] sm:$0xff]
    %v28 = vld [vmem:[#allocation2 + $0x18] sm:$0xff]
    %v29 = vld [vmem:[#allocation2 + $0x20] sm:$0xff]
    %v30 = vld [vmem:[#allocation2 + $0x28] sm:$0xff]
    %v31 = vld [vmem:[#allocation2 + $0x30] sm:$0xff]
    %v32 = vld [vmem:[#allocation2 + $0x38] sm:$0xff]
    %v33 = vld [vmem:[#allocation2 + $0x40] sm:$0xff]
    %v34 = vld [vmem:[#allocation2 + $0x48] sm:$0xff]
    %v35 = vld [vmem:[#allocation2 + $0x50] sm:$0xff]
    %v36 = vld [vmem:[#allocation2 + $0x58] sm:$0xff]
    %v37 = vld [vmem:[#allocation2 + $0x60] sm:$0xff]
    %v38 = vld [vmem:[#allocation2 + $0x68] sm:$0xff]
    %v39 = vld [vmem:[#allocation2 + $0x70] sm:$0xff]
    %v40 = vld [vmem:[#allocation2 + $0x78] sm:$0xff]
    %v41 = vld [vmem:[#allocation2 + $0x80] sm:$0xff]
    %v42 = vld [vmem:[#allocation2 + $0x88] sm:$0xff]
    %v43 = vld [vmem:[#allocation2 + $0x90] sm:$0xff]
    %v44 = vld [vmem:[#allocation2 + $0x98] sm:$0xff]
    %v45 = vld [vmem:[#allocation2 + $0xa0] sm:$0xff]
    %v46 = vld [vmem:[#allocation2 + $0xa8] sm:$0xff]
    %v47 = vld [vmem:[#allocation2 + $0xb0] sm:$0xff]
    %v48 = vld [vmem:[#allocation2 + $0xb8] sm:$0xff]
    %v49 = vld [vmem:[#allocation2 + $0xc0] sm:$0xff]
    %v50 = vld [vmem:[#allocation2 + $0xc8] sm:$0xff]
    %v51 = vld [vmem:[#allocation2 + $0xd0] sm:$0xff]
    %v52 = vld [vmem:[#allocation2 + $0xd8] sm:$0xff]
    %v53 = vld [vmem:[#allocation2 + $0xe0] sm:$0xff]
    %v54 = vld [vmem:[#allocation2 + $0xe8] sm:$0xff]
    %v55 = vld [vmem:[#allocation2 + $0xf0] sm:$0xff]
    %v56 = vld [vmem:[#allocation2 + $0xf8] sm:$0xff]
    %v57 = vld [vmem:[#allocation2 + $0x100] sm:$0xff]
    %v58 = vld [vmem:[#allocation2 + $0x108] sm:$0xff]
    %v59 = vld [vmem:[#allocation2 + $0x110] sm:$0xff]
    %v60 = vld [vmem:[#allocation2 + $0x118] sm:$0xff]
    %v61 = vld [vmem:[#allocation2 + $0x120] sm:$0xff]
    %v62 = vld [vmem:[#allocation2 + $0x128] sm:$0xff]
    %v63 = vld [vmem:[#allocation2 + $0x130] sm:$0xff]
    %v64 = vld [vmem:[#allocation2 + $0x138] sm:$0xff]
    %v65 = vld [vmem:[#allocation2 + $0x140] sm:$0xff]
    %v66 = vld [vmem:[#allocation2 + $0x148] sm:$0xff]
    %v67 = vld [vmem:[#allocation2 + $0x150] sm:$0xff]
    %v68 = vld [vmem:[#allocation2 + $0x158] sm:$0xff]
    %v69 = vld [vmem:[#allocation2 + $0x160] sm:$0xff]
    %v70 = vld [vmem:[#allocation2 + $0x168] sm:$0xff]
    %v71 = vld [vmem:[#allocation2 + $0x170] sm:$0xff]
    %v72 = vld [vmem:[#allocation2 + $0x178] sm:$0xff]
    %v73 = vld [vmem:[#allocation2 + $0x180] sm:$0xff]
    %v74 = vld [vmem:[#allocation2 + $0x188] sm:$0xff]
    %v75 = vld [vmem:[#allocation2 + $0x190] sm:$0xff]
    %v76 = vld [vmem:[#allocation2 + $0x198] sm:$0xff]
    %v77 = vld [vmem:[#allocation2 + $0x1a0] sm:$0xff]
    %v78 = vld [vmem:[#allocation2 + $0x1a8] sm:$0xff]
    %v79 = vld [vmem:[#allocation2 + $0x1b0] sm:$0xff]
    %v80 = vld [vmem:[#allocation2 + $0x1b8] sm:$0xff]
    %v81 = vld [vmem:[#allocation2 + $0x1c0] sm:$0xff]
    %v82 = vld [vmem:[#allocation2 + $0x1c8] sm:$0xff]
    %v83 = vld [vmem:[#allocation2 + $0x1d0] sm:$0xff]
    %v84 = vld [vmem:[#allocation2 + $0x1d8] sm:$0xff]
    %v85 = vld [vmem:[#allocation2 + $0x1e0] sm:$0xff]
    %v86 = vld [vmem:[#allocation2 + $0x1e8] sm:$0xff]
    %v87 = vld [vmem:[#allocation2 + $0x1f0] sm:$0xff]
    %v88 = vld [vmem:[#allocation2 + $0x1f8] sm:$0xff]
    %v89 = vld [vmem:[#allocation2 + $0x200] sm:$0xff]
    %v90 = vld [vmem:[#allocation2 + $0x208] sm:$0xff]
    %v91 = vld [vmem:[#allocation2 + $0x210] sm:$0xff]
    %v92 = vld [vmem:[#allocation2 + $0x218] sm:$0xff]
    %v93 = vld [vmem:[#allocation2 + $0x220] sm:$0xff]
    %v94 = vld [vmem:[#allocation2 + $0x228] sm:$0xff]
    %v95 = vld [vmem:[#allocation2 + $0x230] sm:$0xff]
    %v96 = vld [vmem:[#allocation2 + $0x238] sm:$0xff]
    %v97 = vld [vmem:[#allocation2 + $0x240] sm:$0xff]
    %v98 = vld [vmem:[#allocation2 + $0x248] sm:$0xff]
    %v99 = vld [vmem:[#allocation2 + $0x250] sm:$0xff]
    %v100 = vld [vmem:[#allocation2 + $0x258] sm:$0xff]
    %v101 = vld [vmem:[#allocation2 + $0x260] sm:$0xff]
    %v102 = vld [vmem:[#allocation2 + $0x268] sm:$0xff]
    %v103 = vld [vmem:[#allocation2 + $0x270] sm:$0xff]
    %v104 = vld [vmem:[#allocation2 + $0x278] sm:$0xff]
    %v105 = vld [vmem:[#allocation2 + $0x280] sm:$0xff]
    %v106 = vld [vmem:[#allocation2 + $0x288] sm:$0xff]
    %v107 = vld [vmem:[#allocation2 + $0x290] sm:$0xff]
    %v108 = vld [vmem:[#allocation2 + $0x298] sm:$0xff]
    %v109 = vld [vmem:[#allocation2 + $0x2a0] sm:$0xff]
    %v110 = vld [vmem:[#allocation2 + $0x2a8] sm:$0xff]
    %v111 = vld [vmem:[#allocation2 + $0x2b0] sm:$0xff]
    %v112 = vld [vmem:[#allocation2 + $0x2b8] sm:$0xff]
    %v113 = vld [vmem:[#allocation2 + $0x2c0] sm:$0xff]
    %v114 = vld [vmem:[#allocation2 + $0x2c8] sm:$0xff]
    %v115 = vld [vmem:[#allocation2 + $0x2d0] sm:$0xff]
    %v116 = vld [vmem:[#allocation2 + $0x2d8] sm:$0xff]
    %v117 = vld [vmem:[#allocation2 + $0x2e0] sm:$0xff]
    %v118 = vld [vmem:[#allocation2 + $0x2e8] sm:$0xff]
    %v119 = vld [vmem:[#allocation2 + $0x2f0] sm:$0xff]
    %v120 = vld [vmem:[#allocation2 + $0x2f8] sm:$0xff]
    %v121 = vld [vmem:[#allocation2 + $0x300] sm:$0xff]
    %v122 = vld [vmem:[#allocation2 + $0x308] sm:$0xff]
    %v123 = vld [vmem:[#allocation2 + $0x310] sm:$0xff]
    %v124 = vld [vmem:[#allocation2 + $0x318] sm:$0xff]
    %v125 = vld [vmem:[#allocation2 + $0x320] sm:$0xff]
    %v126 = vld [vmem:[#allocation2 + $0x328] sm:$0xff]
    %v127 = vld [vmem:[#allocation2 + $0x330] sm:$0xff]
    %v128 = vld [vmem:[#allocation2 + $0x338] sm:$0xff]
    %v129 = vld [vmem:[#allocation2 + $0x340] sm:$0xff]
    %v130 = vld [vmem:[#allocation2 + $0x348] sm:$0xff]
    %v131 = vld [vmem:[#allocation2 + $0x350] sm:$0xff]
    %v132 = vld [vmem:[#allocation2 + $0x358] sm:$0xff]
    %v133 = vld [vmem:[#allocation2 + $0x360] sm:$0xff]
    %v134 = vld [vmem:[#allocation2 + $0x368] sm:$0xff]
    %v135 = vld [vmem:[#allocation2 + $0x370] sm:$0xff]
    %v136 = vld [vmem:[#allocation2 + $0x378] sm:$0xff]
    %v137 = vld [vmem:[#allocation2 + $0x380] sm:$0xff]
    %v138 = vld [vmem:[#allocation2 + $0x388] sm:$0xff]
    %v139 = vld [vmem:[#allocation2 + $0x390] sm:$0xff]
    %v140 = vld [vmem:[#allocation2 + $0x398] sm:$0xff]
    %v141 = vld [vmem:[#allocation2 + $0x3a0] sm:$0xff]
    %v142 = vld [vmem:[#allocation2 + $0x3a8] sm:$0xff]
    %v143 = vld [vmem:[#allocation2 + $0x3b0] sm:$0xff]
    %v144 = vld [vmem:[#allocation2 + $0x3b8] sm:$0xff]
    %v145 = vld [vmem:[#allocation2 + $0x3c0] sm:$0xff]
    %v146 = vld [vmem:[#allocation2 + $0x3c8] sm:$0xff]
    %v147 = vld [vmem:[#allocation2 + $0x3d0] sm:$0xff]
    %v148 = vld [vmem:[#allocation2 + $0x3d8] sm:$0xff]
    %v149 = vld [vmem:[#allocation2 + $0x3e0] sm:$0xff]
    %v150 = vld [vmem:[#allocation2 + $0x3e8] sm:$0xff]
    %v151 = vld [vmem:[#allocation2 + $0x3f0] sm:$0xff]
    %v152 = vld [vmem:[#allocation2 + $0x3f8] sm:$0xff]
    %v153 = vadd.f32 %v25, %v26
    %154 = vadd.xlane.f32.xlu0 %v153
    %v155 = vpop.xlane.xlu0 %154
    %v156 = vadd.f32 %v27, %v28
    %157 = vadd.xlane.f32.xlu0 %v156
    %v158 = vpop.xlane.xlu0 %157
    %v159 = vadd.f32 %v29, %v30
    %160 = vadd.xlane.f32.xlu0 %v159
    %v161 = vpop.xlane.xlu0 %160
    %v162 = vadd.f32 %v31, %v32
    %163 = vadd.xlane.f32.xlu0 %v162
    %v164 = vpop.xlane.xlu0 %163
    %v165 = vadd.f32 %v33, %v34
    %166 = vadd.xlane.f32.xlu0 %v165
    %v167 = vpop.xlane.xlu0 %166
    %v168 = vadd.f32 %v35, %v36
    %169 = vadd.xlane.f32.xlu0 %v168
    %v170 = vpop.xlane.xlu0 %169
    %v171 = vadd.f32 %v37, %v38
    %172 = vadd.xlane.f32.xlu0 %v171
    %v173 = vpop.xlane.xlu0 %172
    %v174 = vadd.f32 %v39, %v40
    %175 = vadd.xlane.f32.xlu0 %v174
    %v176 = vpop.xlane.xlu0 %175
    %v177 = vadd.f32 %v41, %v42
    %178 = vadd.xlane.f32.xlu0 %v177
    %v179 = vpop.xlane.xlu0 %178
    %v180 = vadd.f32 %v43, %v44
    %181 = vadd.xlane.f32.xlu0 %v180
    %v182 = vpop.xlane.xlu0 %181
    %v183 = vadd.f32 %v45, %v46
    %184 = vadd.xlane.f32.xlu0 %v183
    %v185 = vpop.xlane.xlu0 %184
    %v186 = vadd.f32 %v47, %v48
    %187 = vadd.xlane.f32.xlu0 %v186
    %v188 = vpop.xlane.xlu0 %187
    %v189 = vadd.f32 %v49, %v50
    %190 = vadd.xlane.f32.xlu0 %v189
    %v191 = vpop.xlane.xlu0 %190
    %v192 = vadd.f32 %v51, %v52
    %193 = vadd.xlane.f32.xlu0 %v192
    %v194 = vpop.xlane.xlu0 %193
    %v195 = vadd.f32 %v53, %v54
    %196 = vadd.xlane.f32.xlu0 %v195
    %v197 = vpop.xlane.xlu0 %196
    %v198 = vadd.f32 %v55, %v56
    %199 = vadd.xlane.f32.xlu0 %v198
    %v200 = vpop.xlane.xlu0 %199
    %v201 = vadd.f32 %v57, %v58
    %202 = vadd.xlane.f32.xlu0 %v201
    %v203 = vpop.xlane.xlu0 %202
    %v204 = vadd.f32 %v59, %v60
    %205 = vadd.xlane.f32.xlu0 %v204
    %v206 = vpop.xlane.xlu0 %205
    %v207 = vadd.f32 %v61, %v62
    %208 = vadd.xlane.f32.xlu0 %v207
    %v209 = vpop.xlane.xlu0 %208
    %v210 = vadd.f32 %v63, %v64
    %211 = vadd.xlane.f32.xlu0 %v210
    %v212 = vpop.xlane.xlu0 %211
    %v213 = vadd.f32 %v65, %v66
    %214 = vadd.xlane.f32.xlu0 %v213
    %v215 = vpop.xlane.xlu0 %214
    %v216 = vadd.f32 %v67, %v68
    %217 = vadd.xlane.f32.xlu0 %v216
    %v218 = vpop.xlane.xlu0 %217
    %v219 = vadd.f32 %v69, %v70
    %220 = vadd.xlane.f32.xlu0 %v219
    %v221 = vpop.xlane.xlu0 %220
    %v222 = vadd.f32 %v71, %v72
    %223 = vadd.xlane.f32.xlu0 %v222
    %v224 = vpop.xlane.xlu0 %223
    %v225 = vadd.f32 %v73, %v74
    %226 = vadd.xlane.f32.xlu0 %v225
    %v227 = vpop.xlane.xlu0 %226
    %v228 = vadd.f32 %v75, %v76
    %229 = vadd.xlane.f32.xlu0 %v228
    %v230 = vpop.xlane.xlu0 %229
    %v231 = vadd.f32 %v77, %v78
    %232 = vadd.xlane.f32.xlu0 %v231
    %v233 = vpop.xlane.xlu0 %232
    %v234 = vadd.f32 %v79, %v80
    %235 = vadd.xlane.f32.xlu0 %v234
    %v236 = vpop.xlane.xlu0 %235
    %v237 = vadd.f32 %v81, %v82
    %238 = vadd.xlane.f32.xlu0 %v237
    %v239 = vpop.xlane.xlu0 %238
    %v240 = vadd.f32 %v83, %v84
    %241 = vadd.xlane.f32.xlu0 %v240
    %v242 = vpop.xlane.xlu0 %241
    %v243 = vadd.f32 %v85, %v86
    %244 = vadd.xlane.f32.xlu0 %v243
    %v245 = vpop.xlane.xlu0 %244
    %v246 = vadd.f32 %v87, %v88
    %247 = vadd.xlane.f32.xlu0 %v246
    %v248 = vpop.xlane.xlu0 %247
    %v249 = vadd.f32 %v89, %v90
    %250 = vadd.xlane.f32.xlu0 %v249
    %v251 = vpop.xlane.xlu0 %250
    %v252 = vadd.f32 %v91, %v92
    %253 = vadd.xlane.f32.xlu0 %v252
    %v254 = vpop.xlane.xlu0 %253
    %v255 = vadd.f32 %v93, %v94
    %256 = vadd.xlane.f32.xlu0 %v255
    %v257 = vpop.xlane.xlu0 %256
    %v258 = vadd.f32 %v95, %v96
    %259 = vadd.xlane.f32.xlu0 %v258
    %v260 = vpop.xlane.xlu0 %259
    %v261 = vadd.f32 %v97, %v98
    %262 = vadd.xlane.f32.xlu0 %v261
    %v263 = vpop.xlane.xlu0 %262
    %v264 = vadd.f32 %v99, %v100
    %265 = vadd.xlane.f32.xlu0 %v264
    %v266 = vpop.xlane.xlu0 %265
    %v267 = vadd.f32 %v101, %v102
    %268 = vadd.xlane.f32.xlu0 %v267
    %v269 = vpop.xlane.xlu0 %268
    %v270 = vadd.f32 %v103, %v104
    %271 = vadd.xlane.f32.xlu0 %v270
    %v272 = vpop.xlane.xlu0 %271
    %v273 = vadd.f32 %v105, %v106
    %274 = vadd.xlane.f32.xlu0 %v273
    %v275 = vpop.xlane.xlu0 %274
    %v276 = vadd.f32 %v107, %v108
    %277 = vadd.xlane.f32.xlu0 %v276
    %v278 = vpop.xlane.xlu0 %277
    %v279 = vadd.f32 %v109, %v110
    %280 = vadd.xlane.f32.xlu0 %v279
    %v281 = vpop.xlane.xlu0 %280
    %v282 = vadd.f32 %v111, %v112
    %283 = vadd.xlane.f32.xlu0 %v282
    %v284 = vpop.xlane.xlu0 %283
    %v285 = vadd.f32 %v113, %v114
    %286 = vadd.xlane.f32.xlu0 %v285
    %v287 = vpop.xlane.xlu0 %286
    %v288 = vadd.f32 %v115, %v116
    %289 = vadd.xlane.f32.xlu0 %v288
    %v290 = vpop.xlane.xlu0 %289
    %v291 = vadd.f32 %v117, %v118
    %292 = vadd.xlane.f32.xlu0 %v291
    %v293 = vpop.xlane.xlu0 %292
    %v294 = vadd.f32 %v119, %v120
    %295 = vadd.xlane.f32.xlu0 %v294
    %v296 = vpop.xlane.xlu0 %295
    %v297 = vadd.f32 %v121, %v122
    %298 = vadd.xlane.f32.xlu0 %v297
    %v299 = vpop.xlane.xlu0 %298
    %v300 = vadd.f32 %v123, %v124
    %301 = vadd.xlane.f32.xlu0 %v300
    %v302 = vpop.xlane.xlu0 %301
    %v303 = vadd.f32 %v125, %v126
    %304 = vadd.xlane.f32.xlu0 %v303
    %v305 = vpop.xlane.xlu0 %304
    %v306 = vadd.f32 %v127, %v128
    %307 = vadd.xlane.f32.xlu0 %v306
    %v308 = vpop.xlane.xlu0 %307
    %v309 = vadd.f32 %v129, %v130
    %310 = vadd.xlane.f32.xlu0 %v309
    %v311 = vpop.xlane.xlu0 %310
    %v312 = vadd.f32 %v131, %v132
    %313 = vadd.xlane.f32.xlu0 %v312
    %v314 = vpop.xlane.xlu0 %313
    %v315 = vadd.f32 %v133, %v134
    %316 = vadd.xlane.f32.xlu0 %v315
    %v317 = vpop.xlane.xlu0 %316
    %v318 = vadd.f32 %v135, %v136
    %319 = vadd.xlane.f32.xlu0 %v318
    %v320 = vpop.xlane.xlu0 %319
    %v321 = vadd.f32 %v137, %v138
    %322 = vadd.xlane.f32.xlu0 %v321
    %v323 = vpop.xlane.xlu0 %322
    %v324 = vadd.f32 %v139, %v140
    %325 = vadd.xlane.f32.xlu0 %v324
    %v326 = vpop.xlane.xlu0 %325
    %v327 = vadd.f32 %v141, %v142
    %328 = vadd.xlane.f32.xlu0 %v327
    %v329 = vpop.xlane.xlu0 %328
    %v330 = vadd.f32 %v143, %v144
    %331 = vadd.xlane.f32.xlu0 %v330
    %v332 = vpop.xlane.xlu0 %331
    %v333 = vadd.f32 %v145, %v146
    %334 = vadd.xlane.f32.xlu0 %v333
    %v335 = vpop.xlane.xlu0 %334
    %v336 = vadd.f32 %v147, %v148
    %337 = vadd.xlane.f32.xlu0 %v336
    %v338 = vpop.xlane.xlu0 %337
    %v339 = vadd.f32 %v149, %v150
    %340 = vadd.xlane.f32.xlu0 %v339
    %v341 = vpop.xlane.xlu0 %340
    %v342 = vadd.f32 %v151, %v152
    %343 = vadd.xlane.f32.xlu0 %v342
    %v344 = vpop.xlane.xlu0 %343
    %v345 = vrcp.pop 256.0
    %v346 = vmul.f32 %v155, %v345
    %v347 = vmul.f32 %v158, %v345
    %v348 = vmul.f32 %v161, %v345
    %v349 = vmul.f32 %v164, %v345
    %v350 = vmul.f32 %v167, %v345
    %v351 = vmul.f32 %v170, %v345
    %v352 = vmul.f32 %v173, %v345
    %v353 = vmul.f32 %v176, %v345
    %v354 = vmul.f32 %v179, %v345
    %v355 = vmul.f32 %v182, %v345
    %v356 = vmul.f32 %v185, %v345
    %v357 = vmul.f32 %v188, %v345
    %v358 = vmul.f32 %v191, %v345
    %v359 = vmul.f32 %v194, %v345
    %v360 = vmul.f32 %v197, %v345
    %v361 = vmul.f32 %v200, %v345
    %v362 = vmul.f32 %v203, %v345
    %v363 = vmul.f32 %v206, %v345
    %v364 = vmul.f32 %v209, %v345
    %v365 = vmul.f32 %v212, %v345
    %v366 = vmul.f32 %v215, %v345
    %v367 = vmul.f32 %v218, %v345
    %v368 = vmul.f32 %v221, %v345
    %v369 = vmul.f32 %v224, %v345
    %v370 = vmul.f32 %v227, %v345
    %v371 = vmul.f32 %v230, %v345
    %v372 = vmul.f32 %v233, %v345
    %v373 = vmul.f32 %v236, %v345
    %v374 = vmul.f32 %v239, %v345
    %v375 = vmul.f32 %v242, %v345
    %v376 = vmul.f32 %v245, %v345
    %v377 = vmul.f32 %v248, %v345
    %v378 = vmul.f32 %v251, %v345
    %v379 = vmul.f32 %v254, %v345
    %v380 = vmul.f32 %v257, %v345
    %v381 = vmul.f32 %v260, %v345
    %v382 = vmul.f32 %v263, %v345
    %v383 = vmul.f32 %v266, %v345
    %v384 = vmul.f32 %v269, %v345
    %v385 = vmul.f32 %v272, %v345
    %v386 = vmul.f32 %v275, %v345
    %v387 = vmul.f32 %v278, %v345
    %v388 = vmul.f32 %v281, %v345
    %v389 = vmul.f32 %v284, %v345
    %v390 = vmul.f32 %v287, %v345
    %v391 = vmul.f32 %v290, %v345
    %v392 = vmul.f32 %v293, %v345
    %v393 = vmul.f32 %v296, %v345
    %v394 = vmul.f32 %v299, %v345
    %v395 = vmul.f32 %v302, %v345
    %v396 = vmul.f32 %v305, %v345
    %v397 = vmul.f32 %v308, %v345
    %v398 = vmul.f32 %v311, %v345
    %v399 = vmul.f32 %v314, %v345
    %v400 = vmul.f32 %v317, %v345
    %v401 = vmul.f32 %v320, %v345
    %v402 = vmul.f32 %v323, %v345
    %v403 = vmul.f32 %v326, %v345
    %v404 = vmul.f32 %v329, %v345
    %v405 = vmul.f32 %v332, %v345
    %v406 = vmul.f32 %v335, %v345
    %v407 = vmul.f32 %v338, %v345
    %v408 = vmul.f32 %v341, %v345
    %v409 = vmul.f32 %v344, %v345
    %v410 = vsub.f32 %v25, %v346
    %v411 = vsub.f32 %v26, %v346
    %v412 = vsub.f32 %v27, %v347
    %v413 = vsub.f32 %v28, %v347
    %v414 = vsub.f32 %v29, %v348
    %v415 = vsub.f32 %v30, %v348
    %v416 = vsub.f32 %v31, %v349
    %v417 = vsub.f32 %v32, %v349
    %v418 = vsub.f32 %v33, %v350
    %v419 = vsub.f32 %v34, %v350
    %v420 = vsub.f32 %v35, %v351
    %v421 = vsub.f32 %v36, %v351
    %v422 = vsub.f32 %v37, %v352
    %v423 = vsub.f32 %v38, %v352
    %v424 = vsub.f32 %v39, %v353
    %v425 = vsub.f32 %v40, %v353
    %v426 = vsub.f32 %v41, %v354
    %v427 = vsub.f32 %v42, %v354
    %v428 = vsub.f32 %v43, %v355
    %v429 = vsub.f32 %v44, %v355
    %v430 = vsub.f32 %v45, %v356
    %v431 = vsub.f32 %v46, %v356
    %v432 = vsub.f32 %v47, %v357
    %v433 = vsub.f32 %v48, %v357
    %v434 = vsub.f32 %v49, %v358
    %v435 = vsub.f32 %v50, %v358
    %v436 = vsub.f32 %v51, %v359
    %v437 = vsub.f32 %v52, %v359
    %v438 = vsub.f32 %v53, %v360
    %v439 = vsub.f32 %v54, %v360
    %v440 = vsub.f32 %v55, %v361
    %v441 = vsub.f32 %v56, %v361
    %v442 = vsub.f32 %v57, %v362
    %v443 = vsub.f32 %v58, %v362
    %v444 = vsub.f32 %v59, %v363
    %v445 = vsub.f32 %v60, %v363
    %v446 = vsub.f32 %v61, %v364
    %v447 = vsub.f32 %v62, %v364
    %v448 = vsub.f32 %v63, %v365
    %v449 = vsub.f32 %v64, %v365
    %v450 = vsub.f32 %v65, %v366
    %v451 = vsub.f32 %v66, %v366
    %v452 = vsub.f32 %v67, %v367
    %v453 = vsub.f32 %v68, %v367
    %v454 = vsub.f32 %v69, %v368
    %v455 = vsub.f32 %v70, %v368
    %v456 = vsub.f32 %v71, %v369
    %v457 = vsub.f32 %v72, %v369
    %v458 = vsub.f32 %v73, %v370
    %v459 = vsub.f32 %v74, %v370
    %v460 = vsub.f32 %v75, %v371
    %v461 = vsub.f32 %v76, %v371
    %v462 = vsub.f32 %v77, %v372
    %v463 = vsub.f32 %v78, %v372
    %v464 = vsub.f32 %v79, %v373
    %v465 = vsub.f32 %v80, %v373
    %v466 = vsub.f32 %v81, %v374
    %v467 = vsub.f32 %v82, %v374
    %v468 = vsub.f32 %v83, %v375
    %v469 = vsub.f32 %v84, %v375
    %v470 = vsub.f32 %v85, %v376
    %v471 = vsub.f32 %v86, %v376
    %v472 = vsub.f32 %v87, %v377
    %v473 = vsub.f32 %v88, %v377
    %v474 = vsub.f32 %v89, %v378
    %v475 = vsub.f32 %v90, %v378
    %v476 = vsub.f32 %v91, %v379
    %v477 = vsub.f32 %v92, %v379
    %v478 = vsub.f32 %v93, %v380
    %v479 = vsub.f32 %v94, %v380
    %v480 = vsub.f32 %v95, %v381
    %v481 = vsub.f32 %v96, %v381
    %v482 = vsub.f32 %v97, %v382
    %v483 = vsub.f32 %v98, %v382
    %v484 = vsub.f32 %v99, %v383
    %v485 = vsub.f32 %v100, %v383
    %v486 = vsub.f32 %v101, %v384
    %v487 = vsub.f32 %v102, %v384
    %v488 = vsub.f32 %v103, %v385
    %v489 = vsub.f32 %v104, %v385
    %v490 = vsub.f32 %v105, %v386
    %v491 = vsub.f32 %v106, %v386
    %v492 = vsub.f32 %v107, %v387
    %v493 = vsub.f32 %v108, %v387
    %v494 = vsub.f32 %v109, %v388
    %v495 = vsub.f32 %v110, %v388
    %v496 = vsub.f32 %v111, %v389
    %v497 = vsub.f32 %v112, %v389
    %v498 = vsub.f32 %v113, %v390
    %v499 = vsub.f32 %v114, %v390
    %v500 = vsub.f32 %v115, %v391
    %v501 = vsub.f32 %v116, %v391
    %v502 = vsub.f32 %v117, %v392
    %v503 = vsub.f32 %v118, %v392
    %v504 = vsub.f32 %v119, %v393
    %v505 = vsub.f32 %v120, %v393
    %v506 = vsub.f32 %v121, %v394
    %v507 = vsub.f32 %v122, %v394
    %v508 = vsub.f32 %v123, %v395
    %v509 = vsub.f32 %v124, %v395
    %v510 = vsub.f32 %v125, %v396
    %v511 = vsub.f32 %v126, %v396
    %v512 = vsub.f32 %v127, %v397
    %v513 = vsub.f32 %v128, %v397
    %v514 = vsub.f32 %v129, %v398
    %v515 = vsub.f32 %v130, %v398
    %v516 = vsub.f32 %v131, %v399
    %v517 = vsub.f32 %v132, %v399
    %v518 = vsub.f32 %v133, %v400
    %v519 = vsub.f32 %v134, %v400
    %v520 = vsub.f32 %v135, %v401
    %v521 = vsub.f32 %v136, %v401
    %v522 = vsub.f32 %v137, %v402
    %v523 = vsub.f32 %v138, %v402
    %v524 = vsub.f32 %v139, %v403
    %v525 = vsub.f32 %v140, %v403
    %v526 = vsub.f32 %v141, %v404
    %v527 = vsub.f32 %v142, %v404
    %v528 = vsub.f32 %v143, %v405
    %v529 = vsub.f32 %v144, %v405
    %v530 = vsub.f32 %v145, %v406
    %v531 = vsub.f32 %v146, %v406
    %v532 = vsub.f32 %v147, %v407
    %v533 = vsub.f32 %v148, %v407
    %v534 = vsub.f32 %v149, %v408
    %v535 = vsub.f32 %v150, %v408
    %v536 = vsub.f32 %v151, %v409
    %v537 = vsub.f32 %v152, %v409
    %538 = vmatprep.subr.mxu0 %v411
    %539 = vmatpush1.xpose.msra.mxu0 %v410
    %540 = vmatprep.subr.mxu0 %v413
    %541 = vmatpush1.xpose.msra.mxu0 %v412
    %542 = vmatprep.subr.mxu0 %v415
    %543 = vmatpush1.xpose.msra.mxu0 %v414
    %544 = vmatprep.subr.mxu0 %v417
    %545 = vmatpush1.xpose.msra.mxu0 %v416
    %546 = vmatprep.subr.mxu0 %v419
    %547 = vmatpush1.xpose.msra.mxu0 %v418
    %548 = vmatprep.subr.mxu0 %v421
    %549 = vmatpush1.xpose.msra.mxu0 %v420
    %550 = vmatprep.subr.mxu0 %v423
    %551 = vmatpush1.xpose.msra.mxu0 %v422
    %552 = vmatprep.subr.mxu0 %v425
    %553 = vmatpush1.xpose.msra.mxu0 %v424
    %554 = vmatprep.subr.mxu0 %v427
    %555 = vmatpush1.xpose.msra.mxu0 %v426
    %556 = vmatprep.subr.mxu0 %v429
    %557 = vmatpush1.xpose.msra.mxu0 %v428
    %558 = vmatprep.subr.mxu0 %v431
    %559 = vmatpush1.xpose.msra.mxu0 %v430
    %560 = vmatprep.subr.mxu0 %v433
    %561 = vmatpush1.xpose.msra.mxu0 %v432
    %562 = vmatprep.subr.mxu0 %v435
    %563 = vmatpush1.xpose.msra.mxu0 %v434
    %564 = vmatprep.subr.mxu0 %v437
    %565 = vmatpush1.xpose.msra.mxu0 %v436
    %566 = vmatprep.subr.mxu0 %v439
    %567 = vmatpush1.xpose.msra.mxu0 %v438
    %568 = vmatprep.subr.mxu0 %v441
    %569 = vmatpush1.xpose.msra.mxu0 %v440
    %570 = vmatprep.subr.mxu0 0.0
    %571 = vmatpush1.xpose.msra.mxu0 0.0
    %572 = vmatprep.subr.mxu0 0.0
    %573 = vmatpush1.xpose.msra.mxu0 0.0
    %574 = vmatprep.subr.mxu0 0.0
    %575 = vmatpush1.xpose.msra.mxu0 0.0
    %576 = vmatprep.subr.mxu0 0.0
    %577 = vmatpush1.xpose.msra.mxu0 0.0
    %578 = vmatprep.subr.mxu0 0.0
    %579 = vmatpush1.xpose.msra.mxu0 0.0
    %580 = vmatprep.subr.mxu0 0.0
    %581 = vmatpush1.xpose.msra.mxu0 0.0
    %582 = vmatprep.subr.mxu0 0.0
    %583 = vmatpush1.xpose.msra.mxu0 0.0
    %584 = vmatprep.subr.mxu0 0.0
    %585 = vmatpush1.xpose.msra.mxu0 0.0
    %586 = vmatprep.subr.mxu0 0.0
    %587 = vmatpush1.xpose.msra.mxu0 0.0
    %588 = vmatprep.subr.mxu0 0.0
    %589 = vmatpush1.xpose.msra.mxu0 0.0
    %590 = vmatprep.subr.mxu0 0.0
    %591 = vmatpush1.xpose.msra.mxu0 0.0
    %592 = vmatprep.subr.mxu0 0.0
    %593 = vmatpush1.xpose.msra.mxu0 0.0
    %594 = vmatprep.subr.mxu0 0.0
    %595 = vmatpush1.xpose.msra.mxu0 0.0
    %596 = vmatprep.subr.mxu0 0.0
    %597 = vmatpush1.xpose.msra.mxu0 0.0
    %598 = vmatprep.subr.mxu0 0.0
    %599 = vmatpush1.xpose.msra.mxu0 0.0
    %600 = vmatprep.subr.mxu0 0.0
    %601 = vmatpush1.xpose.msra.mxu0 0.0
    %602 = vmatprep.mubr.f32.mxu0 %v411
    %603 = vmatmul.mubr.f32.gmra.mrb[0].mxu0 %v410
    %v604 = vpop.f32.mrb[0].mxu0
    %v605 = vadd.f32 0.0, %v604
    %v606 = vpop.f32.mrb[0].mxu0
    %607 = vmatprep.mubr.f32.mxu0 %v413
    %608 = vmatmul.mubr.f32.gmra.mrb[0].mxu0 %v412
    %v609 = vpop.f32.mrb[0].mxu0
    %v610 = vadd.f32 0.0, %v609
    %v611 = vpop.f32.mrb[0].mxu0
    %612 = vmatprep.mubr.f32.mxu0 %v415
    %613 = vmatmul.mubr.f32.gmra.mrb[0].mxu0 %v414
    %v614 = vpop.f32.mrb[0].mxu0
    %v615 = vadd.f32 0.0, %v614
    %v616 = vpop.f32.mrb[0].mxu0
    %617 = vmatprep.mubr.f32.mxu0 %v417
    %618 = vmatmul.mubr.f32.gmra.mrb[0].mxu0 %v416
    %v619 = vpop.f32.mrb[0].mxu0
    %v620 = vadd.f32 0.0, %v619
    %v621 = vpop.f32.mrb[0].mxu0
    %622 = vmatprep.mubr.f32.mxu0 %v419
    %623 = vmatmul.mubr.f32.gmra.mrb[0].mxu0 %v418
    %v624 = vpop.f32.mrb[0].mxu0
    %v625 = vadd.f32 0.0, %v624
    %v626 = vpop.f32.mrb[0].mxu0
    %627 = vmatprep.mubr.f32.mxu0 %v421
    %628 = vmatmul.mubr.f32.gmra.mrb[0].mxu0 %v420
    %v629 = vpop.f32.mrb[0].mxu0
    %v630 = vadd.f32 0.0, %v629
    %v631 = vpop.f32.mrb[0].mxu0
    %632 = vmatprep.mubr.f32.mxu0 %v423
    %633 = vmatmul.mubr.f32.gmra.mrb[0].mxu0 %v422
    %v634 = vpop.f32.mrb[0].mxu0
    %v635 = vadd.f32 0.0, %v634
    %v636 = vpop.f32.mrb[0].mxu0
    %637 = vmatprep.mubr.f32.mxu0 %v425
    %638 = vmatmul.mubr.f32.gmra.mrb[0].mxu0 %v424
    %v639 = vpop.f32.mrb[0].mxu0
    %v640 = vadd.f32 0.0, %v639
    %v641 = vpop.f32.mrb[0].mxu0
    %642 = vmatprep.mubr.f32.mxu0 %v427
    %643 = vmatmul.mubr.f32.gmra.mrb[0].mxu0 %v426
    %v644 = vpop.f32.mrb[0].mxu0
    %v645 = vadd.f32 0.0, %v644
    %v646 = vpop.f32.mrb[0].mxu0
    %647 = vmatprep.mubr.f32.mxu0 %v429
    %648 = vmatmul.mubr.f32.gmra.mrb[0].mxu0 %v428
    %v649 = vpop.f32.mrb[0].mxu0
    %v650 = vadd.f32 0.0, %v649
    %v651 = vpop.f32.mrb[0].mxu0
    %652 = vmatprep.mubr.f32.mxu0 %v431
    %653 = vmatmul.mubr.f32.gmra.mrb[0].mxu0 %v430
    %v654 = vpop.f32.mrb[0].mxu0
    %v655 = vadd.f32 0.0, %v654
    %v656 = vpop.f32.mrb[0].mxu0
    %657 = vmatprep.mubr.f32.mxu0 %v433
    %658 = vmatmul.mubr.f32.gmra.mrb[0].mxu0 %v432
    %v659 = vpop.f32.mrb[0].mxu0
    %v660 = vadd.f32 0.0, %v659
    %v661 = vpop.f32.mrb[0].mxu0
    %662 = vmatprep.mubr.f32.mxu0 %v435
    %663 = vmatmul.mubr.f32.gmra.mrb[0].mxu0 %v434
    %v664 = vpop.f32.mrb[0].mxu0
    %v665 = vadd.f32 0.0, %v664
    %v666 = vpop.f32.mrb[0].mxu0
    %667 = vmatprep.mubr.f32.mxu0 %v437
    %668 = vmatmul.mubr.f32.gmra.mrb[0].mxu0 %v436
    %v669 = vpop.f32.mrb[0].mxu0
    %v670 = vadd.f32 0.0, %v669
    %v671 = vpop.f32.mrb[0].mxu0
    %672 = vmatprep.mubr.f32.mxu0 %v439
    %673 = vmatmul.mubr.f32.gmra.mrb[0].mxu0 %v438
    %v674 = vpop.f32.mrb[0].mxu0
    %v675 = vadd.f32 0.0, %v674
    %v676 = vpop.f32.mrb[0].mxu0
    %677 = vmatprep.mubr.f32.mxu0 %v441
    %678 = vmatmul.mubr.f32.gmra.mrb[0].mxu0 %v440
    %v679 = vpop.f32.mrb[0].mxu0
    %v680 = vadd.f32 0.0, %v679
    %v681 = vpop.f32.mrb[0].mxu0
    %682 = vdwg.mxu0
    %683 = vmatprep.subr.mxu0 %v443
    %684 = vmatpush1.xpose.msra.mxu0 %v442
    %685 = vmatprep.subr.mxu0 %v445
    %686 = vmatpush1.xpose.msra.mxu0 %v444
    %687 = vmatprep.subr.mxu0 %v447
    %688 = vmatpush1.xpose.msra.mxu0 %v446
    %689 = vmatprep.subr.mxu0 %v449
    %690 = vmatpush1.xpose.msra.mxu0 %v448
    %691 = vmatprep.subr.mxu0 %v451
    %692 = vmatpush1.xpose.msra.mxu0 %v450
    %693 = vmatprep.subr.mxu0 %v453
    %694 = vmatpush1.xpose.msra.mxu0 %v452
    %695 = vmatprep.subr.mxu0 %v455
    %696 = vmatpush1.xpose.msra.mxu0 %v454
    %697 = vmatprep.subr.mxu0 %v457
    %698 = vmatpush1.xpose.msra.mxu0 %v456
    %699 = vmatprep.subr.mxu0 %v459
    %700 = vmatpush1.xpose.msra.mxu0 %v458
    %701 = vmatprep.subr.mxu0 %v461
    %702 = vmatpush1.xpose.msra.mxu0 %v460
    %703 = vmatprep.subr.mxu0 %v463
    %704 = vmatpush1.xpose.msra.mxu0 %v462
    %705 = vmatprep.subr.mxu0 %v465
    %706 = vmatpush1.xpose.msra.mxu0 %v464
    %707 = vmatprep.subr.mxu0 %v467
    %708 = vmatpush1.xpose.msra.mxu0 %v466
    %709 = vmatprep.subr.mxu0 %v469
    %710 = vmatpush1.xpose.msra.mxu0 %v468
    %711 = vmatprep.subr.mxu0 %v471
    %712 = vmatpush1.xpose.msra.mxu0 %v470
    %713 = vmatprep.subr.mxu0 %v473
    %714 = vmatpush1.xpose.msra.mxu0 %v472
    %715 = vmatprep.subr.mxu0 0.0
    %716 = vmatpush1.xpose.msra.mxu0 0.0
    %717 = vmatprep.subr.mxu0 0.0
    %718 = vmatpush1.xpose.msra.mxu0 0.0
    %719 = vmatprep.subr.mxu0 0.0
    %720 = vmatpush1.xpose.msra.mxu0 0.0
    %721 = vmatprep.subr.mxu0 0.0
    %722 = vmatpush1.xpose.msra.mxu0 0.0
    %723 = vmatprep.subr.mxu0 0.0
    %724 = vmatpush1.xpose.msra.mxu0 0.0
    %725 = vmatprep.subr.mxu0 0.0
    %726 = vmatpush1.xpose.msra.mxu0 0.0
    %727 = vmatprep.subr.mxu0 0.0
    %728 = vmatpush1.xpose.msra.mxu0 0.0
    %729 = vmatprep.subr.mxu0 0.0
    %730 = vmatpush1.xpose.msra.mxu0 0.0
    %731 = vmatprep.subr.mxu0 0.0
    %732 = vmatpush1.xpose.msra.mxu0 0.0
    %733 = vmatprep.subr.mxu0 0.0
    %734 = vmatpush1.xpose.msra.mxu0 0.0
    %735 = vmatprep.subr.mxu0 0.0
    %736 = vmatpush1.xpose.msra.mxu0 0.0
    %737 = vmatprep.subr.mxu0 0.0
    %738 = vmatpush1.xpose.msra.mxu0 0.0
    %739 = vmatprep.subr.mxu0 0.0
    %740 = vmatpush1.xpose.msra.mxu0 0.0
    %741 = vmatprep.subr.mxu0 0.0
    %742 = vmatpush1.xpose.msra.mxu0 0.0
    %743 = vmatprep.subr.mxu0 0.0
    %744 = vmatpush1.xpose.msra.mxu0 0.0
    %745 = vmatprep.subr.mxu0 0.0
    %746 = vmatpush1.xpose.msra.mxu0 0.0
    %747 = vmatprep.mubr.f32.mxu0 %v443
    %748 = vmatmul.mubr.f32.gmra.mrb[0].mxu0 %v442
    %v749 = vpop.f32.mrb[0].mxu0
    %v750 = vadd.f32 0.0, %v749
    %v751 = vpop.f32.mrb[0].mxu0
    %752 = vmatprep.mubr.f32.mxu0 %v445
    %753 = vmatmul.mubr.f32.gmra.mrb[0].mxu0 %v444
    %v754 = vpop.f32.mrb[0].mxu0
    %v755 = vadd.f32 0.0, %v754
    %v756 = vpop.f32.mrb[0].mxu0
    %757 = vmatprep.mubr.f32.mxu0 %v447
    %758 = vmatmul.mubr.f32.gmra.mrb[0].mxu0 %v446
    %v759 = vpop.f32.mrb[0].mxu0
    %v760 = vadd.f32 0.0, %v759
    %v761 = vpop.f32.mrb[0].mxu0
    %762 = vmatprep.mubr.f32.mxu0 %v449
    %763 = vmatmul.mubr.f32.gmra.mrb[0].mxu0 %v448
    %v764 = vpop.f32.mrb[0].mxu0
    %v765 = vadd.f32 0.0, %v764
    %v766 = vpop.f32.mrb[0].mxu0
    %767 = vmatprep.mubr.f32.mxu0 %v451
    %768 = vmatmul.mubr.f32.gmra.mrb[0].mxu0 %v450
    %v769 = vpop.f32.mrb[0].mxu0
    %v770 = vadd.f32 0.0, %v769
    %v771 = vpop.f32.mrb[0].mxu0
    %772 = vmatprep.mubr.f32.mxu0 %v453
    %773 = vmatmul.mubr.f32.gmra.mrb[0].mxu0 %v452
    %v774 = vpop.f32.mrb[0].mxu0
    %v775 = vadd.f32 0.0, %v774
    %v776 = vpop.f32.mrb[0].mxu0
    %777 = vmatprep.mubr.f32.mxu0 %v455
    %778 = vmatmul.mubr.f32.gmra.mrb[0].mxu0 %v454
    %v779 = vpop.f32.mrb[0].mxu0
    %v780 = vadd.f32 0.0, %v779
    %v781 = vpop.f32.mrb[0].mxu0
    %782 = vmatprep.mubr.f32.mxu0 %v457
    %783 = vmatmul.mubr.f32.gmra.mrb[0].mxu0 %v456
    %v784 = vpop.f32.mrb[0].mxu0
    %v785 = vadd.f32 0.0, %v784
    %v786 = vpop.f32.mrb[0].mxu0
    %787 = vmatprep.mubr.f32.mxu0 %v459
    %788 = vmatmul.mubr.f32.gmra.mrb[0].mxu0 %v458
    %v789 = vpop.f32.mrb[0].mxu0
    %v790 = vadd.f32 0.0, %v789
    %v791 = vpop.f32.mrb[0].mxu0
    %792 = vmatprep.mubr.f32.mxu0 %v461
    %793 = vmatmul.mubr.f32.gmra.mrb[0].mxu0 %v460
    %v794 = vpop.f32.mrb[0].mxu0
    %v795 = vadd.f32 0.0, %v794
    %v796 = vpop.f32.mrb[0].mxu0
    %797 = vmatprep.mubr.f32.mxu0 %v463
    %798 = vmatmul.mubr.f32.gmra.mrb[0].mxu0 %v462
    %v799 = vpop.f32.mrb[0].mxu0
    %v800 = vadd.f32 0.0, %v799
    %v801 = vpop.f32.mrb[0].mxu0
    %802 = vmatprep.mubr.f32.mxu0 %v465
    %803 = vmatmul.mubr.f32.gmra.mrb[0].mxu0 %v464
    %v804 = vpop.f32.mrb[0].mxu0
    %v805 = vadd.f32 0.0, %v804
    %v806 = vpop.f32.mrb[0].mxu0
    %807 = vmatprep.mubr.f32.mxu0 %v467
    %808 = vmatmul.mubr.f32.gmra.mrb[0].mxu0 %v466
    %v809 = vpop.f32.mrb[0].mxu0
    %v810 = vadd.f32 0.0, %v809
    %v811 = vpop.f32.mrb[0].mxu0
    %812 = vmatprep.mubr.f32.mxu0 %v469
    %813 = vmatmul.mubr.f32.gmra.mrb[0].mxu0 %v468
    %v814 = vpop.f32.mrb[0].mxu0
    %v815 = vadd.f32 0.0, %v814
    %v816 = vpop.f32.mrb[0].mxu0
    %817 = vmatprep.mubr.f32.mxu0 %v471
    %818 = vmatmul.mubr.f32.gmra.mrb[0].mxu0 %v470
    %v819 = vpop.f32.mrb[0].mxu0
    %v820 = vadd.f32 0.0, %v819
    %v821 = vpop.f32.mrb[0].mxu0
    %822 = vmatprep.mubr.f32.mxu0 %v473
    %823 = vmatmul.mubr.f32.gmra.mrb[0].mxu0 %v472
    %v824 = vpop.f32.mrb[0].mxu0
    %v825 = vadd.f32 0.0, %v824
    %v826 = vpop.f32.mrb[0].mxu0
    %827 = vdwg.mxu0
    %828 = vmatprep.subr.mxu0 %v475
    %829 = vmatpush1.xpose.msra.mxu0 %v474
    %830 = vmatprep.subr.mxu0 %v477
    %831 = vmatpush1.xpose.msra.mxu0 %v476
    %832 = vmatprep.subr.mxu0 %v479
    %833 = vmatpush1.xpose.msra.mxu0 %v478
    %834 = vmatprep.subr.mxu0 %v481
    %835 = vmatpush1.xpose.msra.mxu0 %v480
    %836 = vmatprep.subr.mxu0 %v483
    %837 = vmatpush1.xpose.msra.mxu0 %v482
    %838 = vmatprep.subr.mxu0 %v485
    %839 = vmatpush1.xpose.msra.mxu0 %v484
    %840 = vmatprep.subr.mxu0 %v487
    %841 = vmatpush1.xpose.msra.mxu0 %v486
    %842 = vmatprep.subr.mxu0 %v489
    %843 = vmatpush1.xpose.msra.mxu0 %v488
    %844 = vmatprep.subr.mxu0 %v491
    %845 = vmatpush1.xpose.msra.mxu0 %v490
    %846 = vmatprep.subr.mxu0 %v493
    %847 = vmatpush1.xpose.msra.mxu0 %v492
    %848 = vmatprep.subr.mxu0 %v495
    %849 = vmatpush1.xpose.msra.mxu0 %v494
    %850 = vmatprep.subr.mxu0 %v497
    %851 = vmatpush1.xpose.msra.mxu0 %v496
    %852 = vmatprep.subr.mxu0 %v499
    %853 = vmatpush1.xpose.msra.mxu0 %v498
    %854 = vmatprep.subr.mxu0 %v501
    %855 = vmatpush1.xpose.msra.mxu0 %v500
    %856 = vmatprep.subr.mxu0 %v503
    %857 = vmatpush1.xpose.msra.mxu0 %v502
    %858 = vmatprep.subr.mxu0 %v505
    %859 = vmatpush1.xpose.msra.mxu0 %v504
    %860 = vmatprep.subr.mxu0 0.0
    %861 = vmatpush1.xpose.msra.mxu0 0.0
    %862 = vmatprep.subr.mxu0 0.0
    %863 = vmatpush1.xpose.msra.mxu0 0.0
    %864 = vmatprep.subr.mxu0 0.0
    %865 = vmatpush1.xpose.msra.mxu0 0.0
    %866 = vmatprep.subr.mxu0 0.0
    %867 = vmatpush1.xpose.msra.mxu0 0.0
    %868 = vmatprep.subr.mxu0 0.0
    %869 = vmatpush1.xpose.msra.mxu0 0.0
    %870 = vmatprep.subr.mxu0 0.0
    %871 = vmatpush1.xpose.msra.mxu0 0.0
    %872 = vmatprep.subr.mxu0 0.0
    %873 = vmatpush1.xpose.msra.mxu0 0.0
    %874 = vmatprep.subr.mxu0 0.0
    %875 = vmatpush1.xpose.msra.mxu0 0.0
    %876 = vmatprep.subr.mxu0 0.0
    %877 = vmatpush1.xpose.msra.mxu0 0.0
    %878 = vmatprep.subr.mxu0 0.0
    %879 = vmatpush1.xpose.msra.mxu0 0.0
    %880 = vmatprep.subr.mxu0 0.0
    %881 = vmatpush1.xpose.msra.mxu0 0.0
    %882 = vmatprep.subr.mxu0 0.0
    %883 = vmatpush1.xpose.msra.mxu0 0.0
    %884 = vmatprep.subr.mxu0 0.0
    %885 = vmatpush1.xpose.msra.mxu0 0.0
    %886 = vmatprep.subr.mxu0 0.0
    %887 = vmatpush1.xpose.msra.mxu0 0.0
    %888 = vmatprep.subr.mxu0 0.0
    %889 = vmatpush1.xpose.msra.mxu0 0.0
    %890 = vmatprep.subr.mxu0 0.0
    %891 = vmatpush1.xpose.msra.mxu0 0.0
    %892 = vmatprep.mubr.f32.mxu0 %v475
    %893 = vmatmul.mubr.f32.gmra.mrb[0].mxu0 %v474
    %v894 = vpop.f32.mrb[0].mxu0
    %v895 = vadd.f32 0.0, %v894
    %v896 = vpop.f32.mrb[0].mxu0
    %897 = vmatprep.mubr.f32.mxu0 %v477
    %898 = vmatmul.mubr.f32.gmra.mrb[0].mxu0 %v476
    %v899 = vpop.f32.mrb[0].mxu0
    %v900 = vadd.f32 0.0, %v899
    %v901 = vpop.f32.mrb[0].mxu0
    %902 = vmatprep.mubr.f32.mxu0 %v479
    %903 = vmatmul.mubr.f32.gmra.mrb[0].mxu0 %v478
    %v904 = vpop.f32.mrb[0].mxu0
    %v905 = vadd.f32 0.0, %v904
    %v906 = vpop.f32.mrb[0].mxu0
    %907 = vmatprep.mubr.f32.mxu0 %v481
    %908 = vmatmul.mubr.f32.gmra.mrb[0].mxu0 %v480
    %v909 = vpop.f32.mrb[0].mxu0
    %v910 = vadd.f32 0.0, %v909
    %v911 = vpop.f32.mrb[0].mxu0
    %912 = vmatprep.mubr.f32.mxu0 %v483
    %913 = vmatmul.mubr.f32.gmra.mrb[0].mxu0 %v482
    %v914 = vpop.f32.mrb[0].mxu0
    %v915 = vadd.f32 0.0, %v914
    %v916 = vpop.f32.mrb[0].mxu0
    %917 = vmatprep.mubr.f32.mxu0 %v485
    %918 = vmatmul.mubr.f32.gmra.mrb[0].mxu0 %v484
    %v919 = vpop.f32.mrb[0].mxu0
    %v920 = vadd.f32 0.0, %v919
    %v921 = vpop.f32.mrb[0].mxu0
    %922 = vmatprep.mubr.f32.mxu0 %v487
    %923 = vmatmul.mubr.f32.gmra.mrb[0].mxu0 %v486
    %v924 = vpop.f32.mrb[0].mxu0
    %v925 = vadd.f32 0.0, %v924
    %v926 = vpop.f32.mrb[0].mxu0
    %927 = vmatprep.mubr.f32.mxu0 %v489
    %928 = vmatmul.mubr.f32.gmra.mrb[0].mxu0 %v488
    %v929 = vpop.f32.mrb[0].mxu0
    %v930 = vadd.f32 0.0, %v929
    %v931 = vpop.f32.mrb[0].mxu0
    %932 = vmatprep.mubr.f32.mxu0 %v491
    %933 = vmatmul.mubr.f32.gmra.mrb[0].mxu0 %v490
    %v934 = vpop.f32.mrb[0].mxu0
    %v935 = vadd.f32 0.0, %v934
    %v936 = vpop.f32.mrb[0].mxu0
    %937 = vmatprep.mubr.f32.mxu0 %v493
    %938 = vmatmul.mubr.f32.gmra.mrb[0].mxu0 %v492
    %v939 = vpop.f32.mrb[0].mxu0
    %v940 = vadd.f32 0.0, %v939
    %v941 = vpop.f32.mrb[0].mxu0
    %942 = vmatprep.mubr.f32.mxu0 %v495
    %943 = vmatmul.mubr.f32.gmra.mrb[0].mxu0 %v494
    %v944 = vpop.f32.mrb[0].mxu0
    %v945 = vadd.f32 0.0, %v944
    %v946 = vpop.f32.mrb[0].mxu0
    %947 = vmatprep.mubr.f32.mxu0 %v497
    %948 = vmatmul.mubr.f32.gmra.mrb[0].mxu0 %v496
    %v949 = vpop.f32.mrb[0].mxu0
    %v950 = vadd.f32 0.0, %v949
    %v951 = vpop.f32.mrb[0].mxu0
    %952 = vmatprep.mubr.f32.mxu0 %v499
    %953 = vmatmul.mubr.f32.gmra.mrb[0].mxu0 %v498
    %v954 = vpop.f32.mrb[0].mxu0
    %v955 = vadd.f32 0.0, %v954
    %v956 = vpop.f32.mrb[0].mxu0
    %957 = vmatprep.mubr.f32.mxu0 %v501
    %958 = vmatmul.mubr.f32.gmra.mrb[0].mxu0 %v500
    %v959 = vpop.f32.mrb[0].mxu0
    %v960 = vadd.f32 0.0, %v959
    %v961 = vpop.f32.mrb[0].mxu0
    %962 = vmatprep.mubr.f32.mxu0 %v503
    %963 = vmatmul.mubr.f32.gmra.mrb[0].mxu0 %v502
    %v964 = vpop.f32.mrb[0].mxu0
    %v965 = vadd.f32 0.0, %v964
    %v966 = vpop.f32.mrb[0].mxu0
    %967 = vmatprep.mubr.f32.mxu0 %v505
    %968 = vmatmul.mubr.f32.gmra.mrb[0].mxu0 %v504
    %v969 = vpop.f32.mrb[0].mxu0
    %v970 = vadd.f32 0.0, %v969
    %v971 = vpop.f32.mrb[0].mxu0
    %972 = vdwg.mxu0
    %973 = vmatprep.subr.mxu0 %v507
    %974 = vmatpush1.xpose.msra.mxu0 %v506
    %975 = vmatprep.subr.mxu0 %v509
    %976 = vmatpush1.xpose.msra.mxu0 %v508
    %977 = vmatprep.subr.mxu0 %v511
    %978 = vmatpush1.xpose.msra.mxu0 %v510
    %979 = vmatprep.subr.mxu0 %v513
    %980 = vmatpush1.xpose.msra.mxu0 %v512
    %981 = vmatprep.subr.mxu0 %v515
    %982 = vmatpush1.xpose.msra.mxu0 %v514
    %983 = vmatprep.subr.mxu0 %v517
    %984 = vmatpush1.xpose.msra.mxu0 %v516
    %985 = vmatprep.subr.mxu0 %v519
    %986 = vmatpush1.xpose.msra.mxu0 %v518
    %987 = vmatprep.subr.mxu0 %v521
    %988 = vmatpush1.xpose.msra.mxu0 %v520
    %989 = vmatprep.subr.mxu0 %v523
    %990 = vmatpush1.xpose.msra.mxu0 %v522
    %991 = vmatprep.subr.mxu0 %v525
    %992 = vmatpush1.xpose.msra.mxu0 %v524
    %993 = vmatprep.subr.mxu0 %v527
    %994 = vmatpush1.xpose.msra.mxu0 %v526
    %995 = vmatprep.subr.mxu0 %v529
    %996 = vmatpush1.xpose.msra.mxu0 %v528
    %997 = vmatprep.subr.mxu0 %v531
    %998 = vmatpush1.xpose.msra.mxu0 %v530
    %999 = vmatprep.subr.mxu0 %v533
    %1000 = vmatpush1.xpose.msra.mxu0 %v532
    %1001 = vmatprep.subr.mxu0 %v535
    %1002 = vmatpush1.xpose.msra.mxu0 %v534
    %1003 = vmatprep.subr.mxu0 %v537
    %1004 = vmatpush1.xpose.msra.mxu0 %v536
    %1005 = vmatprep.subr.mxu0 0.0
    %1006 = vmatpush1.xpose.msra.mxu0 0.0
    %1007 = vmatprep.subr.mxu0 0.0
    %1008 = vmatpush1.xpose.msra.mxu0 0.0
    %1009 = vmatprep.subr.mxu0 0.0
    %1010 = vmatpush1.xpose.msra.mxu0 0.0
    %1011 = vmatprep.subr.mxu0 0.0
    %1012 = vmatpush1.xpose.msra.mxu0 0.0
    %1013 = vmatprep.subr.mxu0 0.0
    %1014 = vmatpush1.xpose.msra.mxu0 0.0
    %1015 = vmatprep.subr.mxu0 0.0
    %1016 = vmatpush1.xpose.msra.mxu0 0.0
    %1017 = vmatprep.subr.mxu0 0.0
    %1018 = vmatpush1.xpose.msra.mxu0 0.0
    %1019 = vmatprep.subr.mxu0 0.0
    %1020 = vmatpush1.xpose.msra.mxu0 0.0
    %1021 = vmatprep.subr.mxu0 0.0
    %1022 = vmatpush1.xpose.msra.mxu0 0.0
    %1023 = vmatprep.subr.mxu0 0.0
    %1024 = vmatpush1.xpose.msra.mxu0 0.0
    %1025 = vmatprep.subr.mxu0 0.0
    %1026 = vmatpush1.xpose.msra.mxu0 0.0
    %1027 = vmatprep.subr.mxu0 0.0
    %1028 = vmatpush1.xpose.msra.mxu0 0.0
    %1029 = vmatprep.subr.mxu0 0.0
    %1030 = vmatpush1.xpose.msra.mxu0 0.0
    %1031 = vmatprep.subr.mxu0 0.0
    %1032 = vmatpush1.xpose.msra.mxu0 0.0
    %1033 = vmatprep.subr.mxu0 0.0
    %1034 = vmatpush1.xpose.msra.mxu0 0.0
    %1035 = vmatprep.subr.mxu0 0.0
    %1036 = vmatpush1.xpose.msra.mxu0 0.0
    %1037 = vmatprep.mubr.f32.mxu0 %v507
    %1038 = vmatmul.mubr.f32.gmra.mrb[0].mxu0 %v506
    %v1039 = vpop.f32.mrb[0].mxu0
    %v1040 = vadd.f32 0.0, %v1039
    %v1041 = vpop.f32.mrb[0].mxu0
    %1042 = vmatprep.mubr.f32.mxu0 %v509
    %1043 = vmatmul.mubr.f32.gmra.mrb[0].mxu0 %v508
    %v1044 = vpop.f32.mrb[0].mxu0
    %v1045 = vadd.f32 0.0, %v1044
    %v1046 = vpop.f32.mrb[0].mxu0
    %1047 = vmatprep.mubr.f32.mxu0 %v511
    %1048 = vmatmul.mubr.f32.gmra.mrb[0].mxu0 %v510
    %v1049 = vpop.f32.mrb[0].mxu0
    %v1050 = vadd.f32 0.0, %v1049
    %v1051 = vpop.f32.mrb[0].mxu0
    %1052 = vmatprep.mubr.f32.mxu0 %v513
    %1053 = vmatmul.mubr.f32.gmra.mrb[0].mxu0 %v512
    %v1054 = vpop.f32.mrb[0].mxu0
    %v1055 = vadd.f32 0.0, %v1054
    %v1056 = vpop.f32.mrb[0].mxu0
    %1057 = vmatprep.mubr.f32.mxu0 %v515
    %1058 = vmatmul.mubr.f32.gmra.mrb[0].mxu0 %v514
    %v1059 = vpop.f32.mrb[0].mxu0
    %v1060 = vadd.f32 0.0, %v1059
    %v1061 = vpop.f32.mrb[0].mxu0
    %1062 = vmatprep.mubr.f32.mxu0 %v517
    %1063 = vmatmul.mubr.f32.gmra.mrb[0].mxu0 %v516
    %v1064 = vpop.f32.mrb[0].mxu0
    %v1065 = vadd.f32 0.0, %v1064
    %v1066 = vpop.f32.mrb[0].mxu0
    %1067 = vmatprep.mubr.f32.mxu0 %v519
    %1068 = vmatmul.mubr.f32.gmra.mrb[0].mxu0 %v518
    %v1069 = vpop.f32.mrb[0].mxu0
    %v1070 = vadd.f32 0.0, %v1069
    %v1071 = vpop.f32.mrb[0].mxu0
    %1072 = vmatprep.mubr.f32.mxu0 %v521
    %1073 = vmatmul.mubr.f32.gmra.mrb[0].mxu0 %v520
    %v1074 = vpop.f32.mrb[0].mxu0
    %v1075 = vadd.f32 0.0, %v1074
    %v1076 = vpop.f32.mrb[0].mxu0
    %1077 = vmatprep.mubr.f32.mxu0 %v523
    %1078 = vmatmul.mubr.f32.gmra.mrb[0].mxu0 %v522
    %v1079 = vpop.f32.mrb[0].mxu0
    %v1080 = vadd.f32 0.0, %v1079
    %v1081 = vpop.f32.mrb[0].mxu0
    %1082 = vmatprep.mubr.f32.mxu0 %v525
    %1083 = vmatmul.mubr.f32.gmra.mrb[0].mxu0 %v524
    %v1084 = vpop.f32.mrb[0].mxu0
    %v1085 = vadd.f32 0.0, %v1084
    %v1086 = vpop.f32.mrb[0].mxu0
    %1087 = vmatprep.mubr.f32.mxu0 %v527
    %1088 = vmatmul.mubr.f32.gmra.mrb[0].mxu0 %v526
    %v1089 = vpop.f32.mrb[0].mxu0
    %v1090 = vadd.f32 0.0, %v1089
    %v1091 = vpop.f32.mrb[0].mxu0
    %1092 = vmatprep.mubr.f32.mxu0 %v529
    %1093 = vmatmul.mubr.f32.gmra.mrb[0].mxu0 %v528
    %v1094 = vpop.f32.mrb[0].mxu0
    %v1095 = vadd.f32 0.0, %v1094
    %v1096 = vpop.f32.mrb[0].mxu0
    %1097 = vmatprep.mubr.f32.mxu0 %v531
    %1098 = vmatmul.mubr.f32.gmra.mrb[0].mxu0 %v530
    %v1099 = vpop.f32.mrb[0].mxu0
    %v1100 = vadd.f32 0.0, %v1099
    %v1101 = vpop.f32.mrb[0].mxu0
    %1102 = vmatprep.mubr.f32.mxu0 %v533
    %1103 = vmatmul.mubr.f32.gmra.mrb[0].mxu0 %v532
    %v1104 = vpop.f32.mrb[0].mxu0
    %v1105 = vadd.f32 0.0, %v1104
    %v1106 = vpop.f32.mrb[0].mxu0
    %1107 = vmatprep.mubr.f32.mxu0 %v535
    %1108 = vmatmul.mubr.f32.gmra.mrb[0].mxu0 %v534
    %v1109 = vpop.f32.mrb[0].mxu0
    %v1110 = vadd.f32 0.0, %v1109
    %v1111 = vpop.f32.mrb[0].mxu0
    %1112 = vmatprep.mubr.f32.mxu0 %v537
    %1113 = vmatmul.mubr.f32.gmra.mrb[0].mxu0 %v536
    %v1114 = vpop.f32.mrb[0].mxu0
    %v1115 = vadd.f32 0.0, %v1114
    %v1116 = vpop.f32.mrb[0].mxu0
    %1117 = vdwg.mxu0
    %v1118 = vmul.f32 %v605, 0.0078125
    %v1119 = vmul.f32 %v610, 0.0078125
    %v1120 = vmul.f32 %v615, 0.0078125
    %v1121 = vmul.f32 %v620, 0.0078125
    %v1122 = vmul.f32 %v625, 0.0078125
    %v1123 = vmul.f32 %v630, 0.0078125
    %v1124 = vmul.f32 %v635, 0.0078125
    %v1125 = vmul.f32 %v640, 0.0078125
    %v1126 = vmul.f32 %v645, 0.0078125
    %v1127 = vmul.f32 %v650, 0.0078125
    %v1128 = vmul.f32 %v655, 0.0078125
    %v1129 = vmul.f32 %v660, 0.0078125
    %v1130 = vmul.f32 %v665, 0.0078125
    %v1131 = vmul.f32 %v670, 0.0078125
    %v1132 = vmul.f32 %v675, 0.0078125
    %v1133 = vmul.f32 %v680, 0.0078125
    %v1134 = vmul.f32 %v750, 0.0078125
    %v1135 = vmul.f32 %v755, 0.0078125
    %v1136 = vmul.f32 %v760, 0.0078125
    %v1137 = vmul.f32 %v765, 0.0078125
    %v1138 = vmul.f32 %v770, 0.0078125
    %v1139 = vmul.f32 %v775, 0.0078125
    %v1140 = vmul.f32 %v780, 0.0078125
    %v1141 = vmul.f32 %v785, 0.0078125
    %v1142 = vmul.f32 %v790, 0.0078125
    %v1143 = vmul.f32 %v795, 0.0078125
    %v1144 = vmul.f32 %v800, 0.0078125
    %v1145 = vmul.f32 %v805, 0.0078125
    %v1146 = vmul.f32 %v810, 0.0078125
    %v1147 = vmul.f32 %v815, 0.0078125
    %v1148 = vmul.f32 %v820, 0.0078125
    %v1149 = vmul.f32 %v825, 0.0078125
    %v1150 = vmul.f32 %v895, 0.0078125
    %v1151 = vmul.f32 %v900, 0.0078125
    %v1152 = vmul.f32 %v905, 0.0078125
    %v1153 = vmul.f32 %v910, 0.0078125
    %v1154 = vmul.f32 %v915, 0.0078125
    %v1155 = vmul.f32 %v920, 0.0078125
    %v1156 = vmul.f32 %v925, 0.0078125
    %v1157 = vmul.f32 %v930, 0.0078125
    %v1158 = vmul.f32 %v935, 0.0078125
    %v1159 = vmul.f32 %v940, 0.0078125
    %v1160 = vmul.f32 %v945, 0.0078125
    %v1161 = vmul.f32 %v950, 0.0078125
    %v1162 = vmul.f32 %v955, 0.0078125
    %v1163 = vmul.f32 %v960, 0.0078125
    %v1164 = vmul.f32 %v965, 0.0078125
    %v1165 = vmul.f32 %v970, 0.0078125
    %v1166 = vmul.f32 %v1040, 0.0078125
    %v1167 = vmul.f32 %v1045, 0.0078125
    %v1168 = vmul.f32 %v1050, 0.0078125
    %v1169 = vmul.f32 %v1055, 0.0078125
    %v1170 = vmul.f32 %v1060, 0.0078125
    %v1171 = vmul.f32 %v1065, 0.0078125
    %v1172 = vmul.f32 %v1070, 0.0078125
    %v1173 = vmul.f32 %v1075, 0.0078125
    %v1174 = vmul.f32 %v1080, 0.0078125
    %v1175 = vmul.f32 %v1085, 0.0078125
    %v1176 = vmul.f32 %v1090, 0.0078125
    %v1177 = vmul.f32 %v1095, 0.0078125
    %v1178 = vmul.f32 %v1100, 0.0078125
    %v1179 = vmul.f32 %v1105, 0.0078125
    %v1180 = vmul.f32 %v1110, 0.0078125
    %v1181 = vmul.f32 %v1115, 0.0078125
    %1182 = vst [vmem:[#allocation5] sm:$0xff] %v1118
    %1183 = vst [vmem:[#allocation5 + $0x8] sm:$0xff] %v1119
    %1184 = vst [vmem:[#allocation5 + $0x10] sm:$0xff] %v1120
    %1185 = vst [vmem:[#allocation5 + $0x18] sm:$0xff] %v1121
    %1186 = vst [vmem:[#allocation5 + $0x20] sm:$0xff] %v1122
    %1187 = vst [vmem:[#allocation5 + $0x28] sm:$0xff] %v1123
    %1188 = vst [vmem:[#allocation5 + $0x30] sm:$0xff] %v1124
    %1189 = vst [vmem:[#allocation5 + $0x38] sm:$0xff] %v1125
    %1190 = vst [vmem:[#allocation5 + $0x40] sm:$0xff] %v1126
    %1191 = vst [vmem:[#allocation5 + $0x48] sm:$0xff] %v1127
    %1192 = vst [vmem:[#allocation5 + $0x50] sm:$0xff] %v1128
    %1193 = vst [vmem:[#allocation5 + $0x58] sm:$0xff] %v1129
    %1194 = vst [vmem:[#allocation5 + $0x60] sm:$0xff] %v1130
    %1195 = vst [vmem:[#allocation5 + $0x68] sm:$0xff] %v1131
    %1196 = vst [vmem:[#allocation5 + $0x70] sm:$0xff] %v1132
    %1197 = vst [vmem:[#allocation5 + $0x78] sm:$0xff] %v1133
    %1198 = vst [vmem:[#allocation5 + $0x80] sm:$0xff] %v1134
    %1199 = vst [vmem:[#allocation5 + $0x88] sm:$0xff] %v1135
    %1200 = vst [vmem:[#allocation5 + $0x90] sm:$0xff] %v1136
    %1201 = vst [vmem:[#allocation5 + $0x98] sm:$0xff] %v1137
    %1202 = vst [vmem:[#allocation5 + $0xa0] sm:$0xff] %v1138
    %1203 = vst [vmem:[#allocation5 + $0xa8] sm:$0xff] %v1139
    %1204 = vst [vmem:[#allocation5 + $0xb0] sm:$0xff] %v1140
    %1205 = vst [vmem:[#allocation5 + $0xb8] sm:$0xff] %v1141
    %1206 = vst [vmem:[#allocation5 + $0xc0] sm:$0xff] %v1142
    %1207 = vst [vmem:[#allocation5 + $0xc8] sm:$0xff] %v1143
    %1208 = vst [vmem:[#allocation5 + $0xd0] sm:$0xff] %v1144
    %1209 = vst [vmem:[#allocation5 + $0xd8] sm:$0xff] %v1145
    %1210 = vst [vmem:[#allocation5 + $0xe0] sm:$0xff] %v1146
    %1211 = vst [vmem:[#allocation5 + $0xe8] sm:$0xff] %v1147
    %1212 = vst [vmem:[#allocation5 + $0xf0] sm:$0xff] %v1148
    %1213 = vst [vmem:[#allocation5 + $0xf8] sm:$0xff] %v1149
    %1214 = vst [vmem:[#allocation5 + $0x100] sm:$0xff] %v1150
    %1215 = vst [vmem:[#allocation5 + $0x108] sm:$0xff] %v1151
    %1216 = vst [vmem:[#allocation5 + $0x110] sm:$0xff] %v1152
    %1217 = vst [vmem:[#allocation5 + $0x118] sm:$0xff] %v1153
    %1218 = vst [vmem:[#allocation5 + $0x120] sm:$0xff] %v1154
    %1219 = vst [vmem:[#allocation5 + $0x128] sm:$0xff] %v1155
    %1220 = vst [vmem:[#allocation5 + $0x130] sm:$0xff] %v1156
    %1221 = vst [vmem:[#allocation5 + $0x138] sm:$0xff] %v1157
    %1222 = vst [vmem:[#allocation5 + $0x140] sm:$0xff] %v1158
    %1223 = vst [vmem:[#allocation5 + $0x148] sm:$0xff] %v1159
    %1224 = vst [vmem:[#allocation5 + $0x150] sm:$0xff] %v1160
    %1225 = vst [vmem:[#allocation5 + $0x158] sm:$0xff] %v1161
    %1226 = vst [vmem:[#allocation5 + $0x160] sm:$0xff] %v1162
    %1227 = vst [vmem:[#allocation5 + $0x168] sm:$0xff] %v1163
    %1228 = vst [vmem:[#allocation5 + $0x170] sm:$0xff] %v1164
    %1229 = vst [vmem:[#allocation5 + $0x178] sm:$0xff] %v1165
    %1230 = vst [vmem:[#allocation5 + $0x180] sm:$0xff] %v1166
    %1231 = vst [vmem:[#allocation5 + $0x188] sm:$0xff] %v1167
    %1232 = vst [vmem:[#allocation5 + $0x190] sm:$0xff] %v1168
    %1233 = vst [vmem:[#allocation5 + $0x198] sm:$0xff] %v1169
    %1234 = vst [vmem:[#allocation5 + $0x1a0] sm:$0xff] %v1170
    %1235 = vst [vmem:[#allocation5 + $0x1a8] sm:$0xff] %v1171
    %1236 = vst [vmem:[#allocation5 + $0x1b0] sm:$0xff] %v1172
    %1237 = vst [vmem:[#allocation5 + $0x1b8] sm:$0xff] %v1173
    %1238 = vst [vmem:[#allocation5 + $0x1c0] sm:$0xff] %v1174
    %1239 = vst [vmem:[#allocation5 + $0x1c8] sm:$0xff] %v1175
    %1240 = vst [vmem:[#allocation5 + $0x1d0] sm:$0xff] %v1176
    %1241 = vst [vmem:[#allocation5 + $0x1d8] sm:$0xff] %v1177
    %1242 = vst [vmem:[#allocation5 + $0x1e0] sm:$0xff] %v1178
    %1243 = vst [vmem:[#allocation5 + $0x1e8] sm:$0xff] %v1179
    %1244 = vst [vmem:[#allocation5 + $0x1f0] sm:$0xff] %v1180
    %1245 = vst [vmem:[#allocation5 + $0x1f8] sm:$0xff] %v1181
    %vm1246 = vcmask 7168
    %1247 = vst.msk [vmem:[%s2] sm:$0xff] %vm1246, %v346
    %1248 = vst.msk [vmem:[%s2 + $0x8] sm:$0xff] %vm1246, %v347
    %1249 = vst.msk [vmem:[%s2 + $0x10] sm:$0xff] %vm1246, %v348
    %1250 = vst.msk [vmem:[%s2 + $0x18] sm:$0xff] %vm1246, %v349
    %1251 = vst.msk [vmem:[%s2 + $0x20] sm:$0xff] %vm1246, %v350
    %1252 = vst.msk [vmem:[%s2 + $0x28] sm:$0xff] %vm1246, %v351
    %1253 = vst.msk [vmem:[%s2 + $0x30] sm:$0xff] %vm1246, %v352
    %1254 = vst.msk [vmem:[%s2 + $0x38] sm:$0xff] %vm1246, %v353
    %1255 = vst.msk [vmem:[%s2 + $0x40] sm:$0xff] %vm1246, %v354
    %1256 = vst.msk [vmem:[%s2 + $0x48] sm:$0xff] %vm1246, %v355
    %1257 = vst.msk [vmem:[%s2 + $0x50] sm:$0xff] %vm1246, %v356
    %1258 = vst.msk [vmem:[%s2 + $0x58] sm:$0xff] %vm1246, %v357
    %1259 = vst.msk [vmem:[%s2 + $0x60] sm:$0xff] %vm1246, %v358
    %1260 = vst.msk [vmem:[%s2 + $0x68] sm:$0xff] %vm1246, %v359
    %1261 = vst.msk [vmem:[%s2 + $0x70] sm:$0xff] %vm1246, %v360
    %1262 = vst.msk [vmem:[%s2 + $0x78] sm:$0xff] %vm1246, %v361
    %1263 = vst.msk [vmem:[%s2 + $0x80] sm:$0xff] %vm1246, %v362
    %1264 = vst.msk [vmem:[%s2 + $0x88] sm:$0xff] %vm1246, %v363
    %1265 = vst.msk [vmem:[%s2 + $0x90] sm:$0xff] %vm1246, %v364
    %1266 = vst.msk [vmem:[%s2 + $0x98] sm:$0xff] %vm1246, %v365
    %1267 = vst.msk [vmem:[%s2 + $0xa0] sm:$0xff] %vm1246, %v366
    %1268 = vst.msk [vmem:[%s2 + $0xa8] sm:$0xff] %vm1246, %v367
    %1269 = vst.msk [vmem:[%s2 + $0xb0] sm:$0xff] %vm1246, %v368
    %1270 = vst.msk [vmem:[%s2 + $0xb8] sm:$0xff] %vm1246, %v369
    %1271 = vst.msk [vmem:[%s2 + $0xc0] sm:$0xff] %vm1246, %v370
    %1272 = vst.msk [vmem:[%s2 + $0xc8] sm:$0xff] %vm1246, %v371
    %1273 = vst.msk [vmem:[%s2 + $0xd0] sm:$0xff] %vm1246, %v372
    %1274 = vst.msk [vmem:[%s2 + $0xd8] sm:$0xff] %vm1246, %v373
    %1275 = vst.msk [vmem:[%s2 + $0xe0] sm:$0xff] %vm1246, %v374
    %1276 = vst.msk [vmem:[%s2 + $0xe8] sm:$0xff] %vm1246, %v375
    %1277 = vst.msk [vmem:[%s2 + $0xf0] sm:$0xff] %vm1246, %v376
    %1278 = vst.msk [vmem:[%s2 + $0xf8] sm:$0xff] %vm1246, %v377
    %1279 = vst.msk [vmem:[%s2 + $0x100] sm:$0xff] %vm1246, %v378
    %1280 = vst.msk [vmem:[%s2 + $0x108] sm:$0xff] %vm1246, %v379
    %1281 = vst.msk [vmem:[%s2 + $0x110] sm:$0xff] %vm1246, %v380
    %1282 = vst.msk [vmem:[%s2 + $0x118] sm:$0xff] %vm1246, %v381
    %1283 = vst.msk [vmem:[%s2 + $0x120] sm:$0xff] %vm1246, %v382
    %1284 = vst.msk [vmem:[%s2 + $0x128] sm:$0xff] %vm1246, %v383
    %1285 = vst.msk [vmem:[%s2 + $0x130] sm:$0xff] %vm1246, %v384
    %1286 = vst.msk [vmem:[%s2 + $0x138] sm:$0xff] %vm1246, %v385
    %1287 = vst.msk [vmem:[%s2 + $0x140] sm:$0xff] %vm1246, %v386
    %1288 = vst.msk [vmem:[%s2 + $0x148] sm:$0xff] %vm1246, %v387
    %1289 = vst.msk [vmem:[%s2 + $0x150] sm:$0xff] %vm1246, %v388
    %1290 = vst.msk [vmem:[%s2 + $0x158] sm:$0xff] %vm1246, %v389
    %1291 = vst.msk [vmem:[%s2 + $0x160] sm:$0xff] %vm1246, %v390
    %1292 = vst.msk [vmem:[%s2 + $0x168] sm:$0xff] %vm1246, %v391
    %1293 = vst.msk [vmem:[%s2 + $0x170] sm:$0xff] %vm1246, %v392
    %1294 = vst.msk [vmem:[%s2 + $0x178] sm:$0xff] %vm1246, %v393
    %1295 = vst.msk [vmem:[%s2 + $0x180] sm:$0xff] %vm1246, %v394
    %1296 = vst.msk [vmem:[%s2 + $0x188] sm:$0xff] %vm1246, %v395
    %1297 = vst.msk [vmem:[%s2 + $0x190] sm:$0xff] %vm1246, %v396
    %1298 = vst.msk [vmem:[%s2 + $0x198] sm:$0xff] %vm1246, %v397
    %1299 = vst.msk [vmem:[%s2 + $0x1a0] sm:$0xff] %vm1246, %v398
    %1300 = vst.msk [vmem:[%s2 + $0x1a8] sm:$0xff] %vm1246, %v399
    %1301 = vst.msk [vmem:[%s2 + $0x1b0] sm:$0xff] %vm1246, %v400
    %1302 = vst.msk [vmem:[%s2 + $0x1b8] sm:$0xff] %vm1246, %v401
    %1303 = vst.msk [vmem:[%s2 + $0x1c0] sm:$0xff] %vm1246, %v402
    %1304 = vst.msk [vmem:[%s2 + $0x1c8] sm:$0xff] %vm1246, %v403
    %1305 = vst.msk [vmem:[%s2 + $0x1d0] sm:$0xff] %vm1246, %v404
    %1306 = vst.msk [vmem:[%s2 + $0x1d8] sm:$0xff] %vm1246, %v405
    %1307 = vst.msk [vmem:[%s2 + $0x1e0] sm:$0xff] %vm1246, %v406
    %1308 = vst.msk [vmem:[%s2 + $0x1e8] sm:$0xff] %vm1246, %v407
    %1309 = vst.msk [vmem:[%s2 + $0x1f0] sm:$0xff] %vm1246, %v408
    %1310 = vst.msk [vmem:[%s2 + $0x1f8] sm:$0xff] %vm1246, %v409
    // Predicated region
    $region10: #{tpu_custom_call.1} parent=1 // pred_check
      _
    $region11: #{tpu_custom_call.1} parent=1 // pred_check_branch
      %1312 = sbr.rel (0) target = $region13
    $region12: #{tpu_custom_call.1} parent=1 // pred_region
      %s1314 = ssub.s32 8192, 8192
      %1315 = vsyncadd [#allocation4], %s1314
      %s1316 = sshll.u32 [#allocation5], 4
      %s1317 = int_to_ptr.vmem [resolvable:$true] %s1316
      %1322 = dma.vmem_to_hbm [thread:$0]  %s1317, 8192, %s1, [#allocation4], 128, 128, 8
    $region13: #{tpu_custom_call.1} parent=1 // pred_fallthru
      _
    // Predicated region
    $region14: #{tpu_custom_call.1} parent=1 // pred_check
      _
    $region15: #{tpu_custom_call.1} parent=1 // pred_check_branch
      %1324 = sbr.rel (0) target = $region17
    $region16: #{tpu_custom_call.1} parent=1 // pred_region
      _
    $region17: #{tpu_custom_call.1} parent=1 // pred_fallthru
      _
    // Predicated region
    $region18: #{tpu_custom_call.1} parent=1 // pred_check
      _
    $region19: #{tpu_custom_call.1} parent=1 // pred_check_branch
      %1326 = sbr.rel (0) target = $region21
    $region20: #{tpu_custom_call.1} parent=1 // pred_region
      %1327 = dma.done [#allocation4], 8192
    $region21: #{tpu_custom_call.1} parent=1 // pred_fallthru
      _
    // Predicated region
    $region22: #{tpu_custom_call.1} parent=1 // pred_check
      _
    $region23: #{tpu_custom_call.1} parent=1 // pred_check_branch
      %1329 = sbr.rel (0) target = $region25
    $region24: #{tpu_custom_call.1} parent=1 // pred_region
      _
    $region25: #{tpu_custom_call.1} parent=1 // pred_fallthru
      _
    %1330 = vsyncpa [#allocation3], 1
    %1331 = vsyncpa [#allocation4], 1

</llo_original>
